<compile_context>
chip_gen: v7x
topology: tpu7x:2x2x1
jax: 0.10.0
libtpu: 0.0.40
codegen_flags: <defaults>
</compile_context>

<pallas_src>
import functools

import jax
import jax.numpy as jnp
from jax import lax
from jax.experimental import pallas as pl
from jax.experimental.pallas import tpu as pltpu


def _attention_pool_kernel(H, W, C, HID,
                           patch_ref,   # (1, H*W, 9*C)   im2col patches
                           w1_ref,      # (9*C, 2*HID)    fused 3x3 weights [att | xf]
                           b1_ref,      # (1, 2*HID)      fused conv bias
                           s_ref,       # (1, 2*HID)      folded BN scale
                           t_ref,       # (1, 2*HID)      folded BN shift
                           w2_ref,      # (2*HID, 2*C)    block-diagonal 1x1 weights
                           b2_ref,      # (1, 2*C)        fused 1x1 bias
                           o_ref):      # (1, W, C)
    p = patch_ref[0]                                    # (H*W, 9*C)

    # Fused 3x3 conv for BOTH branches: a single im2col matmul on the MXU.
    h = jnp.dot(p, w1_ref[...], preferred_element_type=jnp.float32)
    h = h + b1_ref[...]                                 # conv bias
    h = h * s_ref[...] + t_ref[...]                     # folded BatchNorm (eval)
    h = jnp.maximum(h, 0.0)                             # ReLU

    # Fused 1x1 conv: block-diagonal weights keep the two branches independent.
    logits = jnp.dot(h, w2_ref[...], preferred_element_type=jnp.float32)
    logits = logits + b2_ref[...]                       # (H*W, 2*C)

    # Split leading dim only (rows h*W+w -> (h, w)); lane layout untouched.
    logits3 = logits.reshape(H, W, 2 * C)
    att_l = logits3[:, :, :C]                           # attention logits
    xf_l = logits3[:, :, C:]                            # xforward logits

    # softmax over the H axis (PyTorch dim=2 of NCHW)
    m = jnp.max(att_l, axis=0, keepdims=True)
    e = jnp.exp(att_l - m)
    denom = jnp.sum(e, axis=0, keepdims=True)
    att = e * pl.reciprocal(denom, approx=True)         # divide -> EUP reciprocal

    x_fwd = jax.nn.sigmoid(xf_l)
    pooled = jnp.sum(x_fwd * att, axis=0)               # (W, C)

    # 'SE2D_xf_res' residual: mean of x over H == mean of the im2col center tap.
    x_center = p[:, 4 * C:5 * C].reshape(H, W, C)       # tap (dy=1, dx=1)
    res = jnp.mean(x_center, axis=0)                    # (W, C)

    o_ref[0] = pooled + res


def attention_pool_se2d_xf_res(x_nchw, params):
    """x_nchw: (N, C, H, W) float32. Returns (N, C, W) float32."""
    N, C, H, W = x_nchw.shape
    HID = params["wa1"].shape[-1]

    x_nhwc = jnp.transpose(x_nchw, (0, 2, 3, 1)).astype(jnp.float32)
    xp = jnp.pad(x_nhwc, ((0, 0), (1, 1), (1, 1), (0, 0)))

    # im2col in the wrapper: columns ordered (dy, dx, c) to match reshaped weights.
    taps = [xp[:, dy:dy + H, dx:dx + W, :] for dy in range(3) for dx in range(3)]
    patches = jnp.concatenate(taps, axis=-1).reshape(N, H * W, 9 * C)

    # Fuse the attention and xforward branches into one weight set.
    w1f = jnp.concatenate([params["wa1"], params["wx1"]], axis=-1)   # (3,3,C,2*HID)
    w1f = w1f.reshape(9 * C, 2 * HID)
    b1f = jnp.concatenate([params["ba1"], params["bx1"]], axis=-1)   # (1, 2*HID)
    sf = jnp.concatenate([params["sa"], params["sx"]], axis=-1)      # (1, 2*HID)
    tf = jnp.concatenate([params["ta"], params["tx"]], axis=-1)      # (1, 2*HID)
    w2f = jnp.zeros((2 * HID, 2 * C), jnp.float32)
    w2f = w2f.at[:HID, :C].set(params["wa2"])                        # att block
    w2f = w2f.at[HID:, C:].set(params["wx2"])                        # xf block
    b2f = jnp.concatenate([params["ba2"], params["bx2"]], axis=-1)   # (1, 2*C)

    kern = functools.partial(_attention_pool_kernel, H, W, C, HID)

    def full(shape):  # broadcast params: same block for every grid step
        return pl.BlockSpec(shape, lambda n, _s=shape: (0,) * len(_s))

    in_specs = [
        pl.BlockSpec((1, H * W, 9 * C), lambda n: (n, 0, 0)),
        full((9 * C, 2 * HID)),
        full((1, 2 * HID)), full((1, 2 * HID)), full((1, 2 * HID)),
        full((2 * HID, 2 * C)),
        full((1, 2 * C)),
    ]

    out_nwc = pl.pallas_call(
        kern,
        out_shape=jax.ShapeDtypeStruct((N, W, C), jnp.float32),
        grid_spec=pltpu.PrefetchScalarGridSpec(
            num_scalar_prefetch=0,
            grid=(N,),
            in_specs=in_specs,
            out_specs=pl.BlockSpec((1, W, C), lambda n: (n, 0, 0)),
        ),
        compiler_params=pltpu.CompilerParams(
            dimension_semantics=("parallel",)),
    )(patches, w1f, b1f, sf, tf, w2f, b2f)

    return jnp.transpose(out_nwc, (0, 2, 1))            # (N, C, W)


def _reference_nhwc(x_nchw, p):
    """Independent pure-JAX reference (lax.conv) of the same forward."""
    x = jnp.transpose(x_nchw, (0, 2, 3, 1)).astype(jnp.float32)  # NHWC

    def branch(w1, b1, s, t, w2, b2):
        y = lax.conv_general_dilated(
            x, w1, window_strides=(1, 1), padding="SAME",
            dimension_numbers=("NHWC", "HWIO", "NHWC"))
        y = y + b1
        y = y * s + t
        y = jnp.maximum(y, 0.0)
        y = jnp.einsum("nhwc,cd->nhwd", y, w2) + b2
        return y

    att = jax.nn.softmax(
        branch(p["wa1"], p["ba1"], p["sa"], p["ta"], p["wa2"], p["ba2"]), axis=1)
    x_fwd = jax.nn.sigmoid(
        branch(p["wx1"], p["bx1"], p["sx"], p["tx"], p["wx2"], p["bx2"]))
    out = jnp.sum(x_fwd * att, axis=1) + jnp.mean(x, axis=1)     # (N, W, C)
    return jnp.transpose(out, (0, 2, 1))                          # (N, C, W)


def _init_params(key, dim, hid):
    """Deterministic synthetic parameters (BatchNorm folded to scale/shift)."""
    ks = jax.random.split(key, 16)
    eps = 1e-5

    def bn_fold(kg, kb, km, kv):
        gamma = 1.0 + 0.1 * jax.random.normal(kg, (hid,), jnp.float32)
        beta = 0.1 * jax.random.normal(kb, (hid,), jnp.float32)
        mean = 0.1 * jax.random.normal(km, (hid,), jnp.float32)
        var = jax.random.uniform(kv, (hid,), jnp.float32, 0.5, 1.5)
        scale = gamma / jnp.sqrt(var + eps)
        shift = beta - mean * scale
        return scale.reshape(1, hid), shift.reshape(1, hid)

    sa, ta = bn_fold(ks[4], ks[5], ks[6], ks[7])
    sx, tx = bn_fold(ks[12], ks[13], ks[14], ks[15])

    p = {
        "wa1": 0.2 * jax.random.normal(ks[0], (3, 3, dim, hid), jnp.float32),
        "ba1": 0.05 * jax.random.normal(ks[1], (1, hid), jnp.float32),
        "sa": sa, "ta": ta,
        "wa2": 0.2 * jax.random.normal(ks[2], (hid, dim), jnp.float32),
        "ba2": 0.05 * jax.random.normal(ks[3], (1, dim), jnp.float32),
        "wx1": 0.2 * jax.random.normal(ks[8], (3, 3, dim, hid), jnp.float32),
        "bx1": 0.05 * jax.random.normal(ks[9], (1, hid), jnp.float32),
        "sx": sx, "tx": tx,
        "wx2": 0.2 * jax.random.normal(ks[10], (hid, dim), jnp.float32),
        "bx2": 0.05 * jax.random.normal(ks[11], (1, dim), jnp.float32),
    }
    return p


if __name__ == "__main__":
    key = jax.random.PRNGKey(0)
    k_x, k_p = jax.random.split(key)

    N, dim, H, W = 2, 4, 16, 16
    reduction, hid_dim_lim = 4, 4
    hid = max(dim // reduction, hid_dim_lim)        # = 4

    x = jax.random.normal(k_x, (N, dim, H, W), jnp.float32)   # NCHW like PyTorch
    params = _init_params(k_p, dim, hid)

    fwd = jax.jit(attention_pool_se2d_xf_res)
    out = jax.block_until_ready(fwd(x, params))

    ref = jax.block_until_ready(_reference_nhwc(x, params))
    assert out.shape == (N, dim, W), out.shape
    # Tolerance loosened slightly vs exact math because the softmax denominator
    # uses the EUP approximate reciprocal (relative error ~1e-4).
    assert jnp.allclose(out, ref, atol=2e-3, rtol=2e-3), (
        float(jnp.max(jnp.abs(out - ref))))

    print("KERNEL_OK")
</pallas_src>

<mosaic_0001>
module attributes {stable_mosaic.version = 11 : i64} {
  func.func @_attention_pool_kernel(%arg0: i32, %arg1: memref<1x256x36xf32, #tpu.memory_space<vmem>>, %arg2: memref<36x8xf32, #tpu.memory_space<vmem>>, %arg3: memref<1x8xf32, #tpu.memory_space<vmem>>, %arg4: memref<1x8xf32, #tpu.memory_space<vmem>>, %arg5: memref<1x8xf32, #tpu.memory_space<vmem>>, %arg6: memref<8x8xf32, #tpu.memory_space<vmem>>, %arg7: memref<1x8xf32, #tpu.memory_space<vmem>>, %arg8: memref<1x16x4xf32, #tpu.memory_space<vmem>>) attributes {dimension_semantics = [#tpu.dimension_semantics<parallel>], iteration_bounds = array<i64: 2>, scalar_prefetch = 0 : i64, scratch_operands = 0 : i64, tpu.core_type = #tpu.core_type<tc>, window_params = [{transform_indices = @transform_0, window_bounds = array<i64: 1, 256, 36>}, {pipeline_mode = #tpu.pipeline_mode<synchronous>, transform_indices = @transform_1, window_bounds = array<i64: 36, 8>}, {pipeline_mode = #tpu.pipeline_mode<synchronous>, transform_indices = @transform_2, window_bounds = array<i64: 1, 8>}, {pipeline_mode = #tpu.pipeline_mode<synchronous>, transform_indices = @transform_3, window_bounds = array<i64: 1, 8>}, {pipeline_mode = #tpu.pipeline_mode<synchronous>, transform_indices = @transform_4, window_bounds = array<i64: 1, 8>}, {pipeline_mode = #tpu.pipeline_mode<synchronous>, transform_indices = @transform_5, window_bounds = array<i64: 8, 8>}, {pipeline_mode = #tpu.pipeline_mode<synchronous>, transform_indices = @transform_6, window_bounds = array<i64: 1, 8>}, {transform_indices = @transform_7, window_bounds = array<i64: 1, 16, 4>}]} {
    %c0 = arith.constant 0 : index
    %c0_0 = arith.constant 0 : index
    %c0_1 = arith.constant 0 : index
    %0 = vector.load %arg1[%c0, %c0_0, %c0_1] : memref<1x256x36xf32, #tpu.memory_space<vmem>>, vector<1x256x36xf32>
    %1 = vector.shape_cast %0 : vector<1x256x36xf32> to vector<256x36xf32>
    %c0_2 = arith.constant 0 : index
    %c0_3 = arith.constant 0 : index
    %2 = vector.load %arg2[%c0_2, %c0_3] : memref<36x8xf32, #tpu.memory_space<vmem>>, vector<36x8xf32>
    %cst = arith.constant dense<0.000000e+00> : vector<256x8xf32>
    %3 = tpu.matmul %1, %2, %cst {dimension_numbers = #tpu.dot_dimension_numbers<[1], [0], [0], [1], [0, 0, 1, 1], [], []>} : vector<256x36xf32>, vector<36x8xf32>, vector<256x8xf32> -> vector<256x8xf32>
    %c0_4 = arith.constant 0 : index
    %c0_5 = arith.constant 0 : index
    %4 = vector.load %arg3[%c0_4, %c0_5] : memref<1x8xf32, #tpu.memory_space<vmem>>, vector<1x8xf32>
    %5 = vector.broadcast %4 : vector<1x8xf32> to vector<256x8xf32>
    %6 = arith.addf %3, %5 : vector<256x8xf32>
    %c0_6 = arith.constant 0 : index
    %c0_7 = arith.constant 0 : index
    %7 = vector.load %arg4[%c0_6, %c0_7] : memref<1x8xf32, #tpu.memory_space<vmem>>, vector<1x8xf32>
    %8 = vector.broadcast %7 : vector<1x8xf32> to vector<256x8xf32>
    %9 = arith.mulf %6, %8 : vector<256x8xf32>
    %c0_8 = arith.constant 0 : index
    %c0_9 = arith.constant 0 : index
    %10 = vector.load %arg5[%c0_8, %c0_9] : memref<1x8xf32, #tpu.memory_space<vmem>>, vector<1x8xf32>
    %11 = vector.broadcast %10 : vector<1x8xf32> to vector<256x8xf32>
    %12 = arith.addf %9, %11 : vector<256x8xf32>
    %cst_10 = arith.constant 0.000000e+00 : f32
    %13 = vector.broadcast %cst_10 : f32 to vector<256x8xf32>
    %14 = arith.maximumf %12, %13 : vector<256x8xf32>
    %c0_11 = arith.constant 0 : index
    %c0_12 = arith.constant 0 : index
    %15 = vector.load %arg6[%c0_11, %c0_12] : memref<8x8xf32, #tpu.memory_space<vmem>>, vector<8x8xf32>
    %cst_13 = arith.constant dense<0.000000e+00> : vector<256x8xf32>
    %16 = tpu.matmul %14, %15, %cst_13 {dimension_numbers = #tpu.dot_dimension_numbers<[1], [0], [0], [1], [0, 0, 1, 1], [], []>} : vector<256x8xf32>, vector<8x8xf32>, vector<256x8xf32> -> vector<256x8xf32>
    %c0_14 = arith.constant 0 : index
    %c0_15 = arith.constant 0 : index
    %17 = vector.load %arg7[%c0_14, %c0_15] : memref<1x8xf32, #tpu.memory_space<vmem>>, vector<1x8xf32>
    %18 = vector.broadcast %17 : vector<1x8xf32> to vector<256x8xf32>
    %19 = arith.addf %16, %18 : vector<256x8xf32>
    %20 = vector.shape_cast %19 : vector<256x8xf32> to vector<16x16x8xf32>
    %21 = vector.extract_strided_slice %20 {offsets = [0, 0, 0], sizes = [16, 16, 4], strides = [1, 1, 1]} : vector<16x16x8xf32> to vector<16x16x4xf32>
    %22 = vector.extract_strided_slice %20 {offsets = [0, 0, 4], sizes = [16, 16, 4], strides = [1, 1, 1]} : vector<16x16x8xf32> to vector<16x16x4xf32>
    %cst_16 = arith.constant dense<0xFF800000> : vector<16x4xf32>
    %23 = vector.multi_reduction <maximumf>, %21, %cst_16 [0] : vector<16x16x4xf32> to vector<16x4xf32>
    %24 = vector.shape_cast %23 : vector<16x4xf32> to vector<1x16x4xf32>
    %25 = vector.broadcast %24 : vector<1x16x4xf32> to vector<16x16x4xf32>
    %26 = arith.subf %21, %25 : vector<16x16x4xf32>
    %27 = math.exp %26 : vector<16x16x4xf32>
    %cst_17 = arith.constant dense<0.000000e+00> : vector<16x4xf32>
    %28 = vector.multi_reduction <add>, %27, %cst_17 [0] : vector<16x16x4xf32> to vector<16x4xf32>
    %29 = vector.shape_cast %28 : vector<16x4xf32> to vector<1x16x4xf32>
    %30 = tpu.reciprocal %29 {approx = true} : vector<1x16x4xf32> -> vector<1x16x4xf32>
    %31 = vector.broadcast %30 : vector<1x16x4xf32> to vector<16x16x4xf32>
    %32 = arith.mulf %27, %31 : vector<16x16x4xf32>
    %33 = arith.negf %22 : vector<16x16x4xf32>
    %34 = math.exp %33 : vector<16x16x4xf32>
    %cst_18 = arith.constant 1.000000e+00 : f32
    %35 = vector.broadcast %cst_18 : f32 to vector<16x16x4xf32>
    %36 = arith.addf %35, %34 : vector<16x16x4xf32>
    %37 = arith.divf %35, %36 : vector<16x16x4xf32>
    %38 = arith.mulf %37, %32 : vector<16x16x4xf32>
    %cst_19 = arith.constant dense<0.000000e+00> : vector<16x4xf32>
    %39 = vector.multi_reduction <add>, %38, %cst_19 [0] : vector<16x16x4xf32> to vector<16x4xf32>
    %40 = vector.extract_strided_slice %1 {offsets = [0, 16], sizes = [256, 4], strides = [1, 1]} : vector<256x36xf32> to vector<256x4xf32>
    %41 = vector.shape_cast %40 : vector<256x4xf32> to vector<16x16x4xf32>
    %cst_20 = arith.constant dense<0.000000e+00> : vector<16x4xf32>
    %42 = vector.multi_reduction <add>, %41, %cst_20 [0] : vector<16x16x4xf32> to vector<16x4xf32>
    %cst_21 = arith.constant 1.600000e+01 : f32
    %43 = vector.broadcast %cst_21 : f32 to vector<16x4xf32>
    %44 = arith.divf %42, %43 : vector<16x4xf32>
    %45 = arith.addf %39, %44 : vector<16x4xf32>
    %c0_22 = arith.constant 0 : index
    %c0_23 = arith.constant 0 : index
    %c0_24 = arith.constant 0 : index
    %46 = vector.load %arg8[%c0_22, %c0_23, %c0_24] : memref<1x16x4xf32, #tpu.memory_space<vmem>>, vector<1x16x4xf32>
    %47 = vector.shape_cast %46 : vector<1x16x4xf32> to vector<16x4xf32>
    %48 = vector.shape_cast %45 : vector<16x4xf32> to vector<1x16x4xf32>
    tpu.vector_store %arg8[%c0_22, %c0_23, %c0_24], %48 {strides = array<i32>} : memref<1x16x4xf32, #tpu.memory_space<vmem>>, vector<1x16x4xf32>,
    return
  }
  func.func @transform_0(%arg0: i32) -> (i32, i32, i32) {
    %c0_i32 = arith.constant 0 : i32
    %c0_i32_0 = arith.constant 0 : i32
    %c0_i32_1 = arith.constant 0 : i32
    return %arg0, %c0_i32, %c0_i32_0 : i32, i32, i32
  }
  func.func @transform_1(%arg0: i32) -> (i32, i32) {
    %c0_i32 = arith.constant 0 : i32
    %c0_i32_0 = arith.constant 0 : i32
    %c0_i32_1 = arith.constant 0 : i32
    return %c0_i32, %c0_i32_0 : i32, i32
  }
  func.func @transform_2(%arg0: i32) -> (i32, i32) {
    %c0_i32 = arith.constant 0 : i32
    %c0_i32_0 = arith.constant 0 : i32
    %c0_i32_1 = arith.constant 0 : i32
    return %c0_i32, %c0_i32_0 : i32, i32
  }
  func.func @transform_3(%arg0: i32) -> (i32, i32) {
    %c0_i32 = arith.constant 0 : i32
    %c0_i32_0 = arith.constant 0 : i32
    %c0_i32_1 = arith.constant 0 : i32
    return %c0_i32, %c0_i32_0 : i32, i32
  }
  func.func @transform_4(%arg0: i32) -> (i32, i32) {
    %c0_i32 = arith.constant 0 : i32
    %c0_i32_0 = arith.constant 0 : i32
    %c0_i32_1 = arith.constant 0 : i32
    return %c0_i32, %c0_i32_0 : i32, i32
  }
  func.func @transform_5(%arg0: i32) -> (i32, i32) {
    %c0_i32 = arith.constant 0 : i32
    %c0_i32_0 = arith.constant 0 : i32
    %c0_i32_1 = arith.constant 0 : i32
    return %c0_i32, %c0_i32_0 : i32, i32
  }
  func.func @transform_6(%arg0: i32) -> (i32, i32) {
    %c0_i32 = arith.constant 0 : i32
    %c0_i32_0 = arith.constant 0 : i32
    %c0_i32_1 = arith.constant 0 : i32
    return %c0_i32, %c0_i32_0 : i32, i32
  }
  func.func @transform_7(%arg0: i32) -> (i32, i32, i32) {
    %c0_i32 = arith.constant 0 : i32
    %c0_i32_0 = arith.constant 0 : i32
    %c0_i32_1 = arith.constant 0 : i32
    return %arg0, %c0_i32, %c0_i32_0 : i32, i32, i32
  }
}

</mosaic_0001>

<llo_original>
// kernel: attention_pool_se2d_xf_res.1
$region0: #{attention_pool_se2d_xf_res.1}
  #allocation0 [shape = 'u32[]', space=smem, size = 0x4, offset = 0x4, fixed_abs, tag = 'smem constant byte address 0x4 - core index']
  #allocation1 [shape = 'u32[144,128]{1,0:T(1,128)}', space=vmem, size = 0x12000, scoped, tag = 'internal scratch']
  %s0 = inlined_call_operand.vmem [shape: f32[2,256,36], index: 0, kind: input, shape index: {}]
  %s1 = inlined_call_operand.vmem [shape: f32[36,8], index: 1, kind: input, shape index: {}]
  %s2 = inlined_call_operand.vmem [shape: f32[1,8], index: 2, kind: input, shape index: {}]
  %s3 = inlined_call_operand.vmem [shape: f32[1,8], index: 3, kind: input, shape index: {}]
  %s4 = inlined_call_operand.vmem [shape: f32[1,8], index: 4, kind: input, shape index: {}]
  %s5 = inlined_call_operand.vmem [shape: f32[8,8], index: 5, kind: input, shape index: {}]
  %s6 = inlined_call_operand.vmem [shape: f32[1,8], index: 6, kind: input, shape index: {}]
  %s7 = inlined_call_operand.vmem [shape: f32[2,16,4], index: 7, kind: output, shape index: {}]
  %s8 = sld [smem:[#allocation0]]
  $region61: #{attention_pool_se2d_xf_res.1} parent=0
    _
  %s10 = ssub.s32 1, %s8
  %s11 = scalar_select 0, %s10, %s8
  loop: start=0, step=1, limit=4
  $region2: #{attention_pool_se2d_xf_res.1} parent=0 // loop_pre_header
    _
  $region3: #{attention_pool_se2d_xf_res.1} parent=0 // loop_header
    %s13 = sphi 0, %s17
    %p14 = scmp.ge.s32.totalorder %s13, 4
    %s23 = sphi 0, %s25
    %s26 = sphi 0, %s23
    %s27 = sphi 0, %s26
    %s43 = sphi 0, %s27
    %s47 = sphi 0, %s47
    %s49 = sphi 0, %s47
    %s50 = sphi 0, %s49
    %s64 = sphi 0, %s50
    %s68 = sphi 0, %s68
    %s70 = sphi 0, %s68
    %s71 = sphi 0, %s70
    %s85 = sphi 0, %s71
    %s89 = sphi 0, %s89
    %s91 = sphi 0, %s89
    %s92 = sphi 0, %s91
    %s106 = sphi 0, %s92
    %s110 = sphi 0, %s110
    %s112 = sphi 0, %s110
    %s113 = sphi 0, %s112
    %s127 = sphi 0, %s113
    %s131 = sphi 0, %s131
    %s133 = sphi 0, %s131
    %s134 = sphi 0, %s133
    %s148 = sphi 0, %s134
    %s152 = sphi 0, %s152
    %s154 = sphi 0, %s152
    %s155 = sphi 0, %s154
    %s169 = sphi 0, %s155
    %s175 = sphi 0, %s177
    %s178 = sphi 0, %s175
    %s179 = sphi 0, %s178
    %s195 = sphi 0, %s179
  $region4: #{attention_pool_se2d_xf_res.1} parent=0 // loop_header_branch
    %16 = sbr.rel (%p14) target = $region8
  $region5: #{attention_pool_se2d_xf_res.1} parent=0 // loop_body
    %s18 = ssub.s32 %s13, 1
    %s19 = ssub.s32 %s13, 2
    %s20 = sadd.s32 %s13, 1
    %s21 = ssub.s32 %s13, %s20
    %p22 = scmp.eq.s32.totalorder %s21, 0
    %s24 = sadd.s32 %s23, 1
    %s25 = scalar_select %p22, %s23, %s24
    %p28 = pneg %p22
    %p29 = scmp.eq.s32.totalorder %s13, 1
    %p30 = por %p28, %p29
    %p31 = scmp.ne.s32.totalorder %s23, %s26
    %p32 = scmp.eq.s32.totalorder %s13, 0
    %p33 = por %p31, %p32
    %p34 = scmp.ne.s32.totalorder %s23, %s26
    %p35 = scmp.eq.s32.totalorder %s18, 1
    %p36 = por %p34, %p35
    %p37 = scmp.ne.s32.totalorder %s26, %s27
    %p38 = scmp.eq.s32.totalorder %s18, 0
    %p39 = por %p37, %p38
    %p40 = scmp.ne.s32.totalorder %s26, %s27
    %p41 = scmp.eq.s32.totalorder %s19, 1
    %p42 = por %p40, %p41
    %p44 = scmp.ne.s32.totalorder %s27, %s43
    %p45 = scmp.eq.s32.totalorder %s19, 0
    %p46 = por %p44, %p45
    %s48 = sadd.s32 %s47, 1
    %p51 = scmp.eq.s32.totalorder %s13, 1
    %p52 = scmp.ne.s32.totalorder %s47, %s49
    %p53 = scmp.eq.s32.totalorder %s13, 0
    %p54 = por %p52, %p53
    %p55 = scmp.ne.s32.totalorder %s47, %s49
    %p56 = scmp.eq.s32.totalorder %s18, 1
    %p57 = por %p55, %p56
    %p58 = scmp.ne.s32.totalorder %s49, %s50
    %p59 = scmp.eq.s32.totalorder %s18, 0
    %p60 = por %p58, %p59
    %p61 = scmp.ne.s32.totalorder %s49, %s50
    %p62 = scmp.eq.s32.totalorder %s19, 1
    %p63 = por %p61, %p62
    %p65 = scmp.ne.s32.totalorder %s50, %s64
    %p66 = scmp.eq.s32.totalorder %s19, 0
    %p67 = por %p65, %p66
    %s69 = sadd.s32 %s68, 1
    %p72 = scmp.eq.s32.totalorder %s13, 1
    %p73 = scmp.ne.s32.totalorder %s68, %s70
    %p74 = scmp.eq.s32.totalorder %s13, 0
    %p75 = por %p73, %p74
    %p76 = scmp.ne.s32.totalorder %s68, %s70
    %p77 = scmp.eq.s32.totalorder %s18, 1
    %p78 = por %p76, %p77
    %p79 = scmp.ne.s32.totalorder %s70, %s71
    %p80 = scmp.eq.s32.totalorder %s18, 0
    %p81 = por %p79, %p80
    %p82 = scmp.ne.s32.totalorder %s70, %s71
    %p83 = scmp.eq.s32.totalorder %s19, 1
    %p84 = por %p82, %p83
    %p86 = scmp.ne.s32.totalorder %s71, %s85
    %p87 = scmp.eq.s32.totalorder %s19, 0
    %p88 = por %p86, %p87
    %s90 = sadd.s32 %s89, 1
    %p93 = scmp.eq.s32.totalorder %s13, 1
    %p94 = scmp.ne.s32.totalorder %s89, %s91
    %p95 = scmp.eq.s32.totalorder %s13, 0
    %p96 = por %p94, %p95
    %p97 = scmp.ne.s32.totalorder %s89, %s91
    %p98 = scmp.eq.s32.totalorder %s18, 1
    %p99 = por %p97, %p98
    %p100 = scmp.ne.s32.totalorder %s91, %s92
    %p101 = scmp.eq.s32.totalorder %s18, 0
    %p102 = por %p100, %p101
    %p103 = scmp.ne.s32.totalorder %s91, %s92
    %p104 = scmp.eq.s32.totalorder %s19, 1
    %p105 = por %p103, %p104
    %p107 = scmp.ne.s32.totalorder %s92, %s106
    %p108 = scmp.eq.s32.totalorder %s19, 0
    %p109 = por %p107, %p108
    %s111 = sadd.s32 %s110, 1
    %p114 = scmp.eq.s32.totalorder %s13, 1
    %p115 = scmp.ne.s32.totalorder %s110, %s112
    %p116 = scmp.eq.s32.totalorder %s13, 0
    %p117 = por %p115, %p116
    %p118 = scmp.ne.s32.totalorder %s110, %s112
    %p119 = scmp.eq.s32.totalorder %s18, 1
    %p120 = por %p118, %p119
    %p121 = scmp.ne.s32.totalorder %s112, %s113
    %p122 = scmp.eq.s32.totalorder %s18, 0
    %p123 = por %p121, %p122
    %p124 = scmp.ne.s32.totalorder %s112, %s113
    %p125 = scmp.eq.s32.totalorder %s19, 1
    %p126 = por %p124, %p125
    %p128 = scmp.ne.s32.totalorder %s113, %s127
    %p129 = scmp.eq.s32.totalorder %s19, 0
    %p130 = por %p128, %p129
    %s132 = sadd.s32 %s131, 1
    %p135 = scmp.eq.s32.totalorder %s13, 1
    %p136 = scmp.ne.s32.totalorder %s131, %s133
    %p137 = scmp.eq.s32.totalorder %s13, 0
    %p138 = por %p136, %p137
    %p139 = scmp.ne.s32.totalorder %s131, %s133
    %p140 = scmp.eq.s32.totalorder %s18, 1
    %p141 = por %p139, %p140
    %p142 = scmp.ne.s32.totalorder %s133, %s134
    %p143 = scmp.eq.s32.totalorder %s18, 0
    %p144 = por %p142, %p143
    %p145 = scmp.ne.s32.totalorder %s133, %s134
    %p146 = scmp.eq.s32.totalorder %s19, 1
    %p147 = por %p145, %p146
    %p149 = scmp.ne.s32.totalorder %s134, %s148
    %p150 = scmp.eq.s32.totalorder %s19, 0
    %p151 = por %p149, %p150
    %s153 = sadd.s32 %s152, 1
    %p156 = scmp.eq.s32.totalorder %s13, 1
    %p157 = scmp.ne.s32.totalorder %s152, %s154
    %p158 = scmp.eq.s32.totalorder %s13, 0
    %p159 = por %p157, %p158
    %p160 = scmp.ne.s32.totalorder %s152, %s154
    %p161 = scmp.eq.s32.totalorder %s18, 1
    %p162 = por %p160, %p161
    %p163 = scmp.ne.s32.totalorder %s154, %s155
    %p164 = scmp.eq.s32.totalorder %s18, 0
    %p165 = por %p163, %p164
    %p166 = scmp.ne.s32.totalorder %s154, %s155
    %p167 = scmp.eq.s32.totalorder %s19, 1
    %p168 = por %p166, %p167
    %p170 = scmp.ne.s32.totalorder %s155, %s169
    %p171 = scmp.eq.s32.totalorder %s19, 0
    %p172 = por %p170, %p171
    %s173 = ssub.s32 %s13, %s20
    %p174 = scmp.eq.s32.totalorder %s173, 0
    %s176 = sadd.s32 %s175, 1
    %s177 = scalar_select %p174, %s175, %s176
    %p180 = pneg %p174
    %p181 = scmp.eq.s32.totalorder %s13, 1
    %p182 = por %p180, %p181
    %p183 = scmp.ne.s32.totalorder %s175, %s178
    %p184 = scmp.eq.s32.totalorder %s13, 0
    %p185 = por %p183, %p184
    %p186 = scmp.ne.s32.totalorder %s175, %s178
    %p187 = scmp.eq.s32.totalorder %s18, 1
    %p188 = por %p186, %p187
    %p189 = scmp.ne.s32.totalorder %s178, %s179
    %p190 = scmp.eq.s32.totalorder %s18, 0
    %p191 = por %p189, %p190
    %p192 = scmp.ne.s32.totalorder %s178, %s179
    %p193 = scmp.eq.s32.totalorder %s19, 1
    %p194 = por %p192, %p193
    %p196 = scmp.ne.s32.totalorder %s179, %s195
    %p197 = scmp.eq.s32.totalorder %s19, 0
    %p198 = por %p196, %p197
    %p199 = scmp.le.s32.totalorder 1, %s13
    %p200 = scmp.lt.s32.totalorder %s13, 3
    %p201 = pnand %p199, %p200
    %p202 = pneg %p201
    // Predicated region
    $region9: #{attention_pool_se2d_xf_res.1} parent=5 // pred_check
      _
    $region10: #{attention_pool_se2d_xf_res.1} parent=5 // pred_check_branch
      %204 = sbr.rel (%p201) target = $region12
    $region11: #{attention_pool_se2d_xf_res.1} parent=5 // pred_region
      %s205 = ssub.s32 %s13, 1
      // Predicated region
      $region13: #{attention_pool_se2d_xf_res.1} parent=11 // pred_check
        %p206 = pneg %p60
      $region14: #{attention_pool_se2d_xf_res.1} parent=11 // pred_check_branch
        %208 = sbr.rel (%p206) target = $region16
      $region15: #{attention_pool_se2d_xf_res.1} parent=11 // pred_region
        _
      $region16: #{attention_pool_se2d_xf_res.1} parent=11 // pred_fallthru
        _
      // Predicated region
      $region17: #{attention_pool_se2d_xf_res.1} parent=11 // pred_check
        %p209 = pneg %p81
      $region18: #{attention_pool_se2d_xf_res.1} parent=11 // pred_check_branch
        %211 = sbr.rel (%p209) target = $region20
      $region19: #{attention_pool_se2d_xf_res.1} parent=11 // pred_region
        _
      $region20: #{attention_pool_se2d_xf_res.1} parent=11 // pred_fallthru
        _
      // Predicated region
      $region21: #{attention_pool_se2d_xf_res.1} parent=11 // pred_check
        %p212 = pneg %p102
      $region22: #{attention_pool_se2d_xf_res.1} parent=11 // pred_check_branch
        %214 = sbr.rel (%p212) target = $region24
      $region23: #{attention_pool_se2d_xf_res.1} parent=11 // pred_region
        _
      $region24: #{attention_pool_se2d_xf_res.1} parent=11 // pred_fallthru
        _
      // Predicated region
      $region25: #{attention_pool_se2d_xf_res.1} parent=11 // pred_check
        %p215 = pneg %p123
      $region26: #{attention_pool_se2d_xf_res.1} parent=11 // pred_check_branch
        %217 = sbr.rel (%p215) target = $region28
      $region27: #{attention_pool_se2d_xf_res.1} parent=11 // pred_region
        _
      $region28: #{attention_pool_se2d_xf_res.1} parent=11 // pred_fallthru
        _
      // Predicated region
      $region29: #{attention_pool_se2d_xf_res.1} parent=11 // pred_check
        %p218 = pneg %p144
      $region30: #{attention_pool_se2d_xf_res.1} parent=11 // pred_check_branch
        %220 = sbr.rel (%p218) target = $region32
      $region31: #{attention_pool_se2d_xf_res.1} parent=11 // pred_region
        _
      $region32: #{attention_pool_se2d_xf_res.1} parent=11 // pred_fallthru
        _
      // Predicated region
      $region33: #{attention_pool_se2d_xf_res.1} parent=11 // pred_check
        %p221 = pneg %p165
      $region34: #{attention_pool_se2d_xf_res.1} parent=11 // pred_check_branch
        %223 = sbr.rel (%p221) target = $region36
      $region35: #{attention_pool_se2d_xf_res.1} parent=11 // pred_region
        _
      $region36: #{attention_pool_se2d_xf_res.1} parent=11 // pred_fallthru
        _
    $region12: #{attention_pool_se2d_xf_res.1} parent=5 // pred_fallthru
      _
    %p224 = scmp.lt.s32.totalorder %s13, 2
    // Predicated region
    $region37: #{attention_pool_se2d_xf_res.1} parent=5 // pred_check
      %p225 = pneg %p224
    $region38: #{attention_pool_se2d_xf_res.1} parent=5 // pred_check_branch
      %227 = sbr.rel (%p225) target = $region40
    $region39: #{attention_pool_se2d_xf_res.1} parent=5 // pred_region
      // Predicated region
      $region41: #{attention_pool_se2d_xf_res.1} parent=39 // pred_check
        %p228 = pneg %p33
      $region42: #{attention_pool_se2d_xf_res.1} parent=39 // pred_check_branch
        %230 = sbr.rel (%p228) target = $region44
      $region43: #{attention_pool_se2d_xf_res.1} parent=39 // pred_region
        %p231 = scmp.lt.s32.totalorder %s13, 1
        %s232 = scalar_select %p231, %s13, 1
        %s233 = smul.addr %s232, 32
        %s234 = smul.addr %s233, 8
        %s235 = scalar_lea.vmem %s0, %s234
      $region44: #{attention_pool_se2d_xf_res.1} parent=39 // pred_fallthru
        _
    $region40: #{attention_pool_se2d_xf_res.1} parent=5 // pred_fallthru
      _
    %p236 = scmp.le.s32.totalorder 1, %s13
    %p237 = scmp.lt.s32.totalorder %s13, 3
    %p238 = pnand %p236, %p237
    %p239 = pneg %p238
    // Predicated region
    $region45: #{attention_pool_se2d_xf_res.1} parent=5 // pred_check
      _
    $region46: #{attention_pool_se2d_xf_res.1} parent=5 // pred_check_branch
      %241 = sbr.rel (%p238) target = $region48
    $region47: #{attention_pool_se2d_xf_res.1} parent=5 // pred_region
      %s242 = ssub.s32 %s13, 1
      %p243 = scmp.lt.s32.totalorder %s18, 1
      %s244 = scalar_select %p243, %s18, 1
      %s245 = smul.addr %s244, 32
      %s246 = smul.addr %s245, 8
      %s247 = scalar_lea.vmem %s0, %s246
      %p248 = pneg %p39
      %p249 = pneg %p36
      %p250 = pneg %p60
      %p251 = pneg %p57
      %p252 = pneg %p81
      %p253 = pneg %p78
      %p254 = pneg %p102
      %p255 = pneg %p99
      %p256 = pneg %p123
      %p257 = pneg %p120
      %p258 = pneg %p144
      %p259 = pneg %p141
      %p260 = pneg %p165
      %p261 = pneg %p162
      %p262 = pneg %p191
      %p263 = pneg %p188
      %p264 = scmp.lt.s32.totalorder %s18, 1
      %s265 = scalar_select %p264, %s18, 1
      %s266 = smul.addr %s265, 2
      %s267 = smul.addr %s266, 8
      %s268 = scalar_lea.vmem %s7, %s267
      %p269 = scmp.lt.s32.totalorder %s18, 1
      %s270 = scalar_select %p269, %s18, 1
      %s271 = smul.addr %s270, 32
      %s272 = smul.addr %s271, 8
      %s273 = scalar_lea.vmem %s0, %s272
      %p274 = scmp.lt.s32.totalorder %s18, 1
      %s275 = scalar_select %p274, %s18, 1
      %s276 = smul.addr %s275, 2
      %s277 = smul.addr %s276, 8
      %s278 = scalar_lea.vmem %s7, %s277
      %v279 = vld [vmem:[%s273] sm:$0xff]
      %v280 = vld [vmem:[%s273 + $0x8] sm:$0xff]
      %v281 = vld [vmem:[%s273 + $0x10] sm:$0xff]
      %v282 = vld [vmem:[%s273 + $0x18] sm:$0xff]
      %v283 = vld [vmem:[%s273 + $0x20] sm:$0xff]
      %v284 = vld [vmem:[%s273 + $0x28] sm:$0xff]
      %v285 = vld [vmem:[%s273 + $0x30] sm:$0xff]
      %v286 = vld [vmem:[%s273 + $0x38] sm:$0xff]
      %v287 = vld [vmem:[%s273 + $0x40] sm:$0xff]
      %v288 = vld [vmem:[%s273 + $0x48] sm:$0xff]
      %v289 = vld [vmem:[%s273 + $0x50] sm:$0xff]
      %v290 = vld [vmem:[%s273 + $0x58] sm:$0xff]
      %v291 = vld [vmem:[%s273 + $0x60] sm:$0xff]
      %v292 = vld [vmem:[%s273 + $0x68] sm:$0xff]
      %v293 = vld [vmem:[%s273 + $0x70] sm:$0xff]
      %v294 = vld [vmem:[%s273 + $0x78] sm:$0xff]
      %v295 = vld [vmem:[%s273 + $0x80] sm:$0xff]
      %v296 = vld [vmem:[%s273 + $0x88] sm:$0xff]
      %v297 = vld [vmem:[%s273 + $0x90] sm:$0xff]
      %v298 = vld [vmem:[%s273 + $0x98] sm:$0xff]
      %v299 = vld [vmem:[%s273 + $0xa0] sm:$0xff]
      %v300 = vld [vmem:[%s273 + $0xa8] sm:$0xff]
      %v301 = vld [vmem:[%s273 + $0xb0] sm:$0xff]
      %v302 = vld [vmem:[%s273 + $0xb8] sm:$0xff]
      %v303 = vld [vmem:[%s273 + $0xc0] sm:$0xff]
      %v304 = vld [vmem:[%s273 + $0xc8] sm:$0xff]
      %v305 = vld [vmem:[%s273 + $0xd0] sm:$0xff]
      %v306 = vld [vmem:[%s273 + $0xd8] sm:$0xff]
      %v307 = vld [vmem:[%s273 + $0xe0] sm:$0xff]
      %v308 = vld [vmem:[%s273 + $0xe8] sm:$0xff]
      %v309 = vld [vmem:[%s273 + $0xf0] sm:$0xff]
      %v310 = vld [vmem:[%s273 + $0xf8] sm:$0xff]
      %v311 = vld [vmem:[%s1] sm:$0xff]
      %v312 = vld [vmem:[%s1 + $0x8] sm:$0xff]
      %v313 = vld [vmem:[%s1 + $0x10] sm:$0xff]
      %v314 = vld [vmem:[%s1 + $0x18] sm:$0xff]
      %v315 = vld [vmem:[%s1 + $0x20] sm:$0xf]
      %v316 = vld [vmem:[%s2] sm:$0x1]
      %v318 = vlaneseq
      %v319 = vshrl.u32 %v318, 7
      %v320 = vsub.s32 0, %v319
      %v321 = vrot.slane %v316, %v320
      %vm323 = vcmask 293888
      %v325 = vsel %vm323, %v279, 0
      %v328 = vsel %vm323, %v280, 0
      %v331 = vsel %vm323, %v281, 0
      %v334 = vsel %vm323, %v282, 0
      %v337 = vsel %vm323, %v283, 0
      %v340 = vsel %vm323, %v284, 0
      %v343 = vsel %vm323, %v285, 0
      %v346 = vsel %vm323, %v286, 0
      %v349 = vsel %vm323, %v287, 0
      %v352 = vsel %vm323, %v288, 0
      %v355 = vsel %vm323, %v289, 0
      %v358 = vsel %vm323, %v290, 0
      %v361 = vsel %vm323, %v291, 0
      %v364 = vsel %vm323, %v292, 0
      %v367 = vsel %vm323, %v293, 0
      %v370 = vsel %vm323, %v294, 0
      %v373 = vsel %vm323, %v295, 0
      %v376 = vsel %vm323, %v296, 0
      %v379 = vsel %vm323, %v297, 0
      %v382 = vsel %vm323, %v298, 0
      %v385 = vsel %vm323, %v299, 0
      %v388 = vsel %vm323, %v300, 0
      %v391 = vsel %vm323, %v301, 0
      %v394 = vsel %vm323, %v302, 0
      %v397 = vsel %vm323, %v303, 0
      %v400 = vsel %vm323, %v304, 0
      %v403 = vsel %vm323, %v305, 0
      %v406 = vsel %vm323, %v306, 0
      %v409 = vsel %vm323, %v307, 0
      %v412 = vsel %vm323, %v308, 0
      %v415 = vsel %vm323, %v309, 0
      %v418 = vsel %vm323, %v310, 0
      %vm420 = vcmask 1043456
      %v422 = vsel %vm420, %v315, 0
      %424 = vmatprep.subr.mxu0 0.0
      %425 = vmatpush1.msra.mxu0 %v311
      %426 = vmatprep.subr.mxu0 0.0
      %427 = vmatpush1.msra.mxu0 %v312
      %428 = vmatprep.subr.mxu0 0.0
      %429 = vmatpush1.msra.mxu0 %v313
      %430 = vmatprep.subr.mxu0 0.0
      %431 = vmatpush1.msra.mxu0 %v314
      %432 = vmatprep.subr.mxu0 0.0
      %433 = vmatpush1.msra.mxu0 %v422
      %434 = vmatprep.subr.mxu0 0.0
      %435 = vmatpush1.msra.mxu0 0.0
      %436 = vmatprep.subr.mxu0 0.0
      %437 = vmatpush1.msra.mxu0 0.0
      %438 = vmatprep.subr.mxu0 0.0
      %439 = vmatpush1.msra.mxu0 0.0
      %440 = vmatprep.subr.mxu0 0.0
      %441 = vmatpush1.msra.mxu0 0.0
      %442 = vmatprep.subr.mxu0 0.0
      %443 = vmatpush1.msra.mxu0 0.0
      %444 = vmatprep.subr.mxu0 0.0
      %445 = vmatpush1.msra.mxu0 0.0
      %446 = vmatprep.subr.mxu0 0.0
      %447 = vmatpush1.msra.mxu0 0.0
      %448 = vmatprep.subr.mxu0 0.0
      %449 = vmatpush1.msra.mxu0 0.0
      %450 = vmatprep.subr.mxu0 0.0
      %451 = vmatpush1.msra.mxu0 0.0
      %452 = vmatprep.subr.mxu0 0.0
      %453 = vmatpush1.msra.mxu0 0.0
      %454 = vmatprep.subr.mxu0 0.0
      %455 = vmatpush1.msra.mxu0 0.0
      %456 = vmatprep.subr.mxu0 0.0
      %457 = vmatpush1.msra.mxu0 0.0
      %458 = vmatprep.subr.mxu0 0.0
      %459 = vmatpush1.msra.mxu0 0.0
      %460 = vmatprep.subr.mxu0 0.0
      %461 = vmatpush1.msra.mxu0 0.0
      %462 = vmatprep.subr.mxu0 0.0
      %463 = vmatpush1.msra.mxu0 0.0
      %464 = vmatprep.subr.mxu0 0.0
      %465 = vmatpush1.msra.mxu0 0.0
      %466 = vmatprep.subr.mxu0 0.0
      %467 = vmatpush1.msra.mxu0 0.0
      %468 = vmatprep.subr.mxu0 0.0
      %469 = vmatpush1.msra.mxu0 0.0
      %470 = vmatprep.subr.mxu0 0.0
      %471 = vmatpush1.msra.mxu0 0.0
      %472 = vmatprep.subr.mxu0 0.0
      %473 = vmatpush1.msra.mxu0 0.0
      %474 = vmatprep.subr.mxu0 0.0
      %475 = vmatpush1.msra.mxu0 0.0
      %476 = vmatprep.subr.mxu0 0.0
      %477 = vmatpush1.msra.mxu0 0.0
      %478 = vmatprep.subr.mxu0 0.0
      %479 = vmatpush1.msra.mxu0 0.0
      %480 = vmatprep.subr.mxu0 0.0
      %481 = vmatpush1.msra.mxu0 0.0
      %482 = vmatprep.subr.mxu0 0.0
      %483 = vmatpush1.msra.mxu0 0.0
      %484 = vmatprep.subr.mxu0 0.0
      %485 = vmatpush1.msra.mxu0 0.0
      %486 = vmatprep.subr.mxu0 0.0
      %487 = vmatpush1.msra.mxu0 0.0
      %488 = vmatprep.mubr.f32.mxu0 0.0
      %489 = vmatmul.mubr.f32.gmra.mrb[0].mxu0 %v325
      %v490 = vpop.f32.mrb[0].mxu0
      %v491 = vadd.f32 %v321, %v490
      %v492 = vpop.f32.mrb[0].mxu0
      %493 = vmatprep.mubr.f32.mxu0 0.0
      %494 = vmatmul.mubr.f32.gmra.mrb[0].mxu0 %v328
      %v495 = vpop.f32.mrb[0].mxu0
      %v496 = vadd.f32 %v321, %v495
      %v497 = vpop.f32.mrb[0].mxu0
      %498 = vmatprep.mubr.f32.mxu0 0.0
      %499 = vmatmul.mubr.f32.gmra.mrb[0].mxu0 %v331
      %v500 = vpop.f32.mrb[0].mxu0
      %v501 = vadd.f32 %v321, %v500
      %v502 = vpop.f32.mrb[0].mxu0
      %503 = vmatprep.mubr.f32.mxu0 0.0
      %504 = vmatmul.mubr.f32.gmra.mrb[0].mxu0 %v334
      %v505 = vpop.f32.mrb[0].mxu0
      %v506 = vadd.f32 %v321, %v505
      %v507 = vpop.f32.mrb[0].mxu0
      %508 = vmatprep.mubr.f32.mxu0 0.0
      %509 = vmatmul.mubr.f32.gmra.mrb[0].mxu0 %v337
      %v510 = vpop.f32.mrb[0].mxu0
      %v511 = vadd.f32 %v321, %v510
      %v512 = vpop.f32.mrb[0].mxu0
      %513 = vmatprep.mubr.f32.mxu0 0.0
      %514 = vmatmul.mubr.f32.gmra.mrb[0].mxu0 %v340
      %v515 = vpop.f32.mrb[0].mxu0
      %v516 = vadd.f32 %v321, %v515
      %v517 = vpop.f32.mrb[0].mxu0
      %518 = vmatprep.mubr.f32.mxu0 0.0
      %519 = vmatmul.mubr.f32.gmra.mrb[0].mxu0 %v343
      %v520 = vpop.f32.mrb[0].mxu0
      %v521 = vadd.f32 %v321, %v520
      %v522 = vpop.f32.mrb[0].mxu0
      %523 = vmatprep.mubr.f32.mxu0 0.0
      %524 = vmatmul.mubr.f32.gmra.mrb[0].mxu0 %v346
      %v525 = vpop.f32.mrb[0].mxu0
      %v526 = vadd.f32 %v321, %v525
      %v527 = vpop.f32.mrb[0].mxu0
      %528 = vmatprep.mubr.f32.mxu0 0.0
      %529 = vmatmul.mubr.f32.gmra.mrb[0].mxu0 %v349
      %v530 = vpop.f32.mrb[0].mxu0
      %v531 = vadd.f32 %v321, %v530
      %v532 = vpop.f32.mrb[0].mxu0
      %533 = vmatprep.mubr.f32.mxu0 0.0
      %534 = vmatmul.mubr.f32.gmra.mrb[0].mxu0 %v352
      %v535 = vpop.f32.mrb[0].mxu0
      %v536 = vadd.f32 %v321, %v535
      %v537 = vpop.f32.mrb[0].mxu0
      %538 = vmatprep.mubr.f32.mxu0 0.0
      %539 = vmatmul.mubr.f32.gmra.mrb[0].mxu0 %v355
      %v540 = vpop.f32.mrb[0].mxu0
      %v541 = vadd.f32 %v321, %v540
      %v542 = vpop.f32.mrb[0].mxu0
      %543 = vmatprep.mubr.f32.mxu0 0.0
      %544 = vmatmul.mubr.f32.gmra.mrb[0].mxu0 %v358
      %v545 = vpop.f32.mrb[0].mxu0
      %v546 = vadd.f32 %v321, %v545
      %v547 = vpop.f32.mrb[0].mxu0
      %548 = vmatprep.mubr.f32.mxu0 0.0
      %549 = vmatmul.mubr.f32.gmra.mrb[0].mxu0 %v361
      %v550 = vpop.f32.mrb[0].mxu0
      %v551 = vadd.f32 %v321, %v550
      %v552 = vpop.f32.mrb[0].mxu0
      %553 = vmatprep.mubr.f32.mxu0 0.0
      %554 = vmatmul.mubr.f32.gmra.mrb[0].mxu0 %v364
      %v555 = vpop.f32.mrb[0].mxu0
      %v556 = vadd.f32 %v321, %v555
      %v557 = vpop.f32.mrb[0].mxu0
      %558 = vmatprep.mubr.f32.mxu0 0.0
      %559 = vmatmul.mubr.f32.gmra.mrb[0].mxu0 %v367
      %v560 = vpop.f32.mrb[0].mxu0
      %v561 = vadd.f32 %v321, %v560
      %v562 = vpop.f32.mrb[0].mxu0
      %563 = vmatprep.mubr.f32.mxu0 0.0
      %564 = vmatmul.mubr.f32.gmra.mrb[0].mxu0 %v370
      %v565 = vpop.f32.mrb[0].mxu0
      %v566 = vadd.f32 %v321, %v565
      %v567 = vpop.f32.mrb[0].mxu0
      %568 = vmatprep.mubr.f32.mxu0 0.0
      %569 = vmatmul.mubr.f32.gmra.mrb[0].mxu0 %v373
      %v570 = vpop.f32.mrb[0].mxu0
      %v571 = vadd.f32 %v321, %v570
      %v572 = vpop.f32.mrb[0].mxu0
      %573 = vmatprep.mubr.f32.mxu0 0.0
      %574 = vmatmul.mubr.f32.gmra.mrb[0].mxu0 %v376
      %v575 = vpop.f32.mrb[0].mxu0
      %v576 = vadd.f32 %v321, %v575
      %v577 = vpop.f32.mrb[0].mxu0
      %578 = vmatprep.mubr.f32.mxu0 0.0
      %579 = vmatmul.mubr.f32.gmra.mrb[0].mxu0 %v379
      %v580 = vpop.f32.mrb[0].mxu0
      %v581 = vadd.f32 %v321, %v580
      %v582 = vpop.f32.mrb[0].mxu0
      %583 = vmatprep.mubr.f32.mxu0 0.0
      %584 = vmatmul.mubr.f32.gmra.mrb[0].mxu0 %v382
      %v585 = vpop.f32.mrb[0].mxu0
      %v586 = vadd.f32 %v321, %v585
      %v587 = vpop.f32.mrb[0].mxu0
      %588 = vmatprep.mubr.f32.mxu0 0.0
      %589 = vmatmul.mubr.f32.gmra.mrb[0].mxu0 %v385
      %v590 = vpop.f32.mrb[0].mxu0
      %v591 = vadd.f32 %v321, %v590
      %v592 = vpop.f32.mrb[0].mxu0
      %593 = vmatprep.mubr.f32.mxu0 0.0
      %594 = vmatmul.mubr.f32.gmra.mrb[0].mxu0 %v388
      %v595 = vpop.f32.mrb[0].mxu0
      %v596 = vadd.f32 %v321, %v595
      %v597 = vpop.f32.mrb[0].mxu0
      %598 = vmatprep.mubr.f32.mxu0 0.0
      %599 = vmatmul.mubr.f32.gmra.mrb[0].mxu0 %v391
      %v600 = vpop.f32.mrb[0].mxu0
      %v601 = vadd.f32 %v321, %v600
      %v602 = vpop.f32.mrb[0].mxu0
      %603 = vmatprep.mubr.f32.mxu0 0.0
      %604 = vmatmul.mubr.f32.gmra.mrb[0].mxu0 %v394
      %v605 = vpop.f32.mrb[0].mxu0
      %v606 = vadd.f32 %v321, %v605
      %v607 = vpop.f32.mrb[0].mxu0
      %608 = vmatprep.mubr.f32.mxu0 0.0
      %609 = vmatmul.mubr.f32.gmra.mrb[0].mxu0 %v397
      %v610 = vpop.f32.mrb[0].mxu0
      %v611 = vadd.f32 %v321, %v610
      %v612 = vpop.f32.mrb[0].mxu0
      %613 = vmatprep.mubr.f32.mxu0 0.0
      %614 = vmatmul.mubr.f32.gmra.mrb[0].mxu0 %v400
      %v615 = vpop.f32.mrb[0].mxu0
      %v616 = vadd.f32 %v321, %v615
      %v617 = vpop.f32.mrb[0].mxu0
      %618 = vmatprep.mubr.f32.mxu0 0.0
      %619 = vmatmul.mubr.f32.gmra.mrb[0].mxu0 %v403
      %v620 = vpop.f32.mrb[0].mxu0
      %v621 = vadd.f32 %v321, %v620
      %v622 = vpop.f32.mrb[0].mxu0
      %623 = vmatprep.mubr.f32.mxu0 0.0
      %624 = vmatmul.mubr.f32.gmra.mrb[0].mxu0 %v406
      %v625 = vpop.f32.mrb[0].mxu0
      %v626 = vadd.f32 %v321, %v625
      %v627 = vpop.f32.mrb[0].mxu0
      %628 = vmatprep.mubr.f32.mxu0 0.0
      %629 = vmatmul.mubr.f32.gmra.mrb[0].mxu0 %v409
      %v630 = vpop.f32.mrb[0].mxu0
      %v631 = vadd.f32 %v321, %v630
      %v632 = vpop.f32.mrb[0].mxu0
      %633 = vmatprep.mubr.f32.mxu0 0.0
      %634 = vmatmul.mubr.f32.gmra.mrb[0].mxu0 %v412
      %v635 = vpop.f32.mrb[0].mxu0
      %v636 = vadd.f32 %v321, %v635
      %v637 = vpop.f32.mrb[0].mxu0
      %638 = vmatprep.mubr.f32.mxu0 0.0
      %639 = vmatmul.mubr.f32.gmra.mrb[0].mxu0 %v415
      %v640 = vpop.f32.mrb[0].mxu0
      %v641 = vadd.f32 %v321, %v640
      %v642 = vpop.f32.mrb[0].mxu0
      %643 = vmatprep.mubr.f32.mxu0 0.0
      %644 = vmatmul.mubr.f32.gmra.mrb[0].mxu0 %v418
      %v645 = vpop.f32.mrb[0].mxu0
      %v646 = vadd.f32 %v321, %v645
      %v647 = vpop.f32.mrb[0].mxu0
      %648 = vdwg.mxu0
      %v649 = vld [vmem:[%s3] sm:$0x1]
      %v651 = vlaneseq
      %v652 = vshrl.u32 %v651, 7
      %v653 = vsub.s32 0, %v652
      %v654 = vrot.slane %v649, %v653
      %v656 = vmul.f32 %v491, %v654
      %v657 = vmul.f32 %v496, %v654
      %v658 = vmul.f32 %v501, %v654
      %v659 = vmul.f32 %v506, %v654
      %v660 = vmul.f32 %v511, %v654
      %v661 = vmul.f32 %v516, %v654
      %v662 = vmul.f32 %v521, %v654
      %v663 = vmul.f32 %v526, %v654
      %v664 = vmul.f32 %v531, %v654
      %v665 = vmul.f32 %v536, %v654
      %v666 = vmul.f32 %v541, %v654
      %v667 = vmul.f32 %v546, %v654
      %v668 = vmul.f32 %v551, %v654
      %v669 = vmul.f32 %v556, %v654
      %v670 = vmul.f32 %v561, %v654
      %v671 = vmul.f32 %v566, %v654
      %v672 = vmul.f32 %v571, %v654
      %v673 = vmul.f32 %v576, %v654
      %v674 = vmul.f32 %v581, %v654
      %v675 = vmul.f32 %v586, %v654
      %v676 = vmul.f32 %v591, %v654
      %v677 = vmul.f32 %v596, %v654
      %v678 = vmul.f32 %v601, %v654
      %v679 = vmul.f32 %v606, %v654
      %v680 = vmul.f32 %v611, %v654
      %v681 = vmul.f32 %v616, %v654
      %v682 = vmul.f32 %v621, %v654
      %v683 = vmul.f32 %v626, %v654
      %v684 = vmul.f32 %v631, %v654
      %v685 = vmul.f32 %v636, %v654
      %v686 = vmul.f32 %v641, %v654
      %v687 = vmul.f32 %v646, %v654
      %v688 = vld [vmem:[%s4] sm:$0x1]
      %v690 = vlaneseq
      %v691 = vshrl.u32 %v690, 7
      %v692 = vsub.s32 0, %v691
      %v693 = vrot.slane %v688, %v692
      %v695 = vadd.f32 %v656, %v693
      %v696 = vadd.f32 %v657, %v693
      %v697 = vadd.f32 %v658, %v693
      %v698 = vadd.f32 %v659, %v693
      %v699 = vadd.f32 %v660, %v693
      %v700 = vadd.f32 %v661, %v693
      %v701 = vadd.f32 %v662, %v693
      %v702 = vadd.f32 %v663, %v693
      %v703 = vadd.f32 %v664, %v693
      %v704 = vadd.f32 %v665, %v693
      %v705 = vadd.f32 %v666, %v693
      %v706 = vadd.f32 %v667, %v693
      %v707 = vadd.f32 %v668, %v693
      %v708 = vadd.f32 %v669, %v693
      %v709 = vadd.f32 %v670, %v693
      %v710 = vadd.f32 %v671, %v693
      %v711 = vadd.f32 %v672, %v693
      %v712 = vadd.f32 %v673, %v693
      %v713 = vadd.f32 %v674, %v693
      %v714 = vadd.f32 %v675, %v693
      %v715 = vadd.f32 %v676, %v693
      %v716 = vadd.f32 %v677, %v693
      %v717 = vadd.f32 %v678, %v693
      %v718 = vadd.f32 %v679, %v693
      %v719 = vadd.f32 %v680, %v693
      %v720 = vadd.f32 %v681, %v693
      %v721 = vadd.f32 %v682, %v693
      %v722 = vadd.f32 %v683, %v693
      %v723 = vadd.f32 %v684, %v693
      %v724 = vadd.f32 %v685, %v693
      %v725 = vadd.f32 %v686, %v693
      %v726 = vadd.f32 %v687, %v693
      %v727 = vmax.f32 %v695, 0.0
      %v728 = vmax.f32 %v696, 0.0
      %v729 = vmax.f32 %v697, 0.0
      %v730 = vmax.f32 %v698, 0.0
      %v731 = vmax.f32 %v699, 0.0
      %v732 = vmax.f32 %v700, 0.0
      %v733 = vmax.f32 %v701, 0.0
      %v734 = vmax.f32 %v702, 0.0
      %v735 = vmax.f32 %v703, 0.0
      %v736 = vmax.f32 %v704, 0.0
      %v737 = vmax.f32 %v705, 0.0
      %v738 = vmax.f32 %v706, 0.0
      %v739 = vmax.f32 %v707, 0.0
      %v740 = vmax.f32 %v708, 0.0
      %v741 = vmax.f32 %v709, 0.0
      %v742 = vmax.f32 %v710, 0.0
      %v743 = vmax.f32 %v711, 0.0
      %v744 = vmax.f32 %v712, 0.0
      %v745 = vmax.f32 %v713, 0.0
      %v746 = vmax.f32 %v714, 0.0
      %v747 = vmax.f32 %v715, 0.0
      %v748 = vmax.f32 %v716, 0.0
      %v749 = vmax.f32 %v717, 0.0
      %v750 = vmax.f32 %v718, 0.0
      %v751 = vmax.f32 %v719, 0.0
      %v752 = vmax.f32 %v720, 0.0
      %v753 = vmax.f32 %v721, 0.0
      %v754 = vmax.f32 %v722, 0.0
      %v755 = vmax.f32 %v723, 0.0
      %v756 = vmax.f32 %v724, 0.0
      %v757 = vmax.f32 %v725, 0.0
      %v758 = vmax.f32 %v726, 0.0
      %v759 = vld [vmem:[%s5] sm:$0xff]
      %v760 = vld [vmem:[%s6] sm:$0x1]
      %v762 = vlaneseq
      %v763 = vshrl.u32 %v762, 7
      %v764 = vsub.s32 0, %v763
      %v765 = vrot.slane %v760, %v764
      %vm767 = vcmask 64512
      %v769 = vsel %vm767, %v727, 0
      %v772 = vsel %vm767, %v728, 0
      %v775 = vsel %vm767, %v729, 0
      %v778 = vsel %vm767, %v730, 0
      %v781 = vsel %vm767, %v731, 0
      %v784 = vsel %vm767, %v732, 0
      %v787 = vsel %vm767, %v733, 0
      %v790 = vsel %vm767, %v734, 0
      %v793 = vsel %vm767, %v735, 0
      %v796 = vsel %vm767, %v736, 0
      %v799 = vsel %vm767, %v737, 0
      %v802 = vsel %vm767, %v738, 0
      %v805 = vsel %vm767, %v739, 0
      %v808 = vsel %vm767, %v740, 0
      %v811 = vsel %vm767, %v741, 0
      %v814 = vsel %vm767, %v742, 0
      %v817 = vsel %vm767, %v743, 0
      %v820 = vsel %vm767, %v744, 0
      %v823 = vsel %vm767, %v745, 0
      %v826 = vsel %vm767, %v746, 0
      %v829 = vsel %vm767, %v747, 0
      %v832 = vsel %vm767, %v748, 0
      %v835 = vsel %vm767, %v749, 0
      %v838 = vsel %vm767, %v750, 0
      %v841 = vsel %vm767, %v751, 0
      %v844 = vsel %vm767, %v752, 0
      %v847 = vsel %vm767, %v753, 0
      %v850 = vsel %vm767, %v754, 0
      %v853 = vsel %vm767, %v755, 0
      %v856 = vsel %vm767, %v756, 0
      %v859 = vsel %vm767, %v757, 0
      %v862 = vsel %vm767, %v758, 0
      %864 = vmatprep.subr.mxu0 0.0
      %865 = vmatpush1.msra.mxu0 %v759
      %866 = vmatprep.subr.mxu0 0.0
      %867 = vmatpush1.msra.mxu0 0.0
      %868 = vmatprep.subr.mxu0 0.0
      %869 = vmatpush1.msra.mxu0 0.0
      %870 = vmatprep.subr.mxu0 0.0
      %871 = vmatpush1.msra.mxu0 0.0
      %872 = vmatprep.subr.mxu0 0.0
      %873 = vmatpush1.msra.mxu0 0.0
      %874 = vmatprep.subr.mxu0 0.0
      %875 = vmatpush1.msra.mxu0 0.0
      %876 = vmatprep.subr.mxu0 0.0
      %877 = vmatpush1.msra.mxu0 0.0
      %878 = vmatprep.subr.mxu0 0.0
      %879 = vmatpush1.msra.mxu0 0.0
      %880 = vmatprep.subr.mxu0 0.0
      %881 = vmatpush1.msra.mxu0 0.0
      %882 = vmatprep.subr.mxu0 0.0
      %883 = vmatpush1.msra.mxu0 0.0
      %884 = vmatprep.subr.mxu0 0.0
      %885 = vmatpush1.msra.mxu0 0.0
      %886 = vmatprep.subr.mxu0 0.0
      %887 = vmatpush1.msra.mxu0 0.0
      %888 = vmatprep.subr.mxu0 0.0
      %889 = vmatpush1.msra.mxu0 0.0
      %890 = vmatprep.subr.mxu0 0.0
      %891 = vmatpush1.msra.mxu0 0.0
      %892 = vmatprep.subr.mxu0 0.0
      %893 = vmatpush1.msra.mxu0 0.0
      %894 = vmatprep.subr.mxu0 0.0
      %895 = vmatpush1.msra.mxu0 0.0
      %896 = vmatprep.subr.mxu0 0.0
      %897 = vmatpush1.msra.mxu0 0.0
      %898 = vmatprep.subr.mxu0 0.0
      %899 = vmatpush1.msra.mxu0 0.0
      %900 = vmatprep.subr.mxu0 0.0
      %901 = vmatpush1.msra.mxu0 0.0
      %902 = vmatprep.subr.mxu0 0.0
      %903 = vmatpush1.msra.mxu0 0.0
      %904 = vmatprep.subr.mxu0 0.0
      %905 = vmatpush1.msra.mxu0 0.0
      %906 = vmatprep.subr.mxu0 0.0
      %907 = vmatpush1.msra.mxu0 0.0
      %908 = vmatprep.subr.mxu0 0.0
      %909 = vmatpush1.msra.mxu0 0.0
      %910 = vmatprep.subr.mxu0 0.0
      %911 = vmatpush1.msra.mxu0 0.0
      %912 = vmatprep.subr.mxu0 0.0
      %913 = vmatpush1.msra.mxu0 0.0
      %914 = vmatprep.subr.mxu0 0.0
      %915 = vmatpush1.msra.mxu0 0.0
      %916 = vmatprep.subr.mxu0 0.0
      %917 = vmatpush1.msra.mxu0 0.0
      %918 = vmatprep.subr.mxu0 0.0
      %919 = vmatpush1.msra.mxu0 0.0
      %920 = vmatprep.subr.mxu0 0.0
      %921 = vmatpush1.msra.mxu0 0.0
      %922 = vmatprep.subr.mxu0 0.0
      %923 = vmatpush1.msra.mxu0 0.0
      %924 = vmatprep.subr.mxu0 0.0
      %925 = vmatpush1.msra.mxu0 0.0
      %926 = vmatprep.subr.mxu0 0.0
      %927 = vmatpush1.msra.mxu0 0.0
      %928 = vmatprep.mubr.f32.mxu0 0.0
      %929 = vmatmul.mubr.f32.gmra.mrb[0].mxu0 %v769
      %v930 = vpop.f32.mrb[0].mxu0
      %v931 = vadd.f32 %v765, %v930
      %v932 = vpop.f32.mrb[0].mxu0
      %933 = vmatprep.mubr.f32.mxu0 0.0
      %934 = vmatmul.mubr.f32.gmra.mrb[0].mxu0 %v772
      %v935 = vpop.f32.mrb[0].mxu0
      %v936 = vadd.f32 %v765, %v935
      %v937 = vpop.f32.mrb[0].mxu0
      %938 = vmatprep.mubr.f32.mxu0 0.0
      %939 = vmatmul.mubr.f32.gmra.mrb[0].mxu0 %v775
      %v940 = vpop.f32.mrb[0].mxu0
      %v941 = vadd.f32 %v765, %v940
      %v942 = vpop.f32.mrb[0].mxu0
      %943 = vmatprep.mubr.f32.mxu0 0.0
      %944 = vmatmul.mubr.f32.gmra.mrb[0].mxu0 %v778
      %v945 = vpop.f32.mrb[0].mxu0
      %v946 = vadd.f32 %v765, %v945
      %v947 = vpop.f32.mrb[0].mxu0
      %948 = vmatprep.mubr.f32.mxu0 0.0
      %949 = vmatmul.mubr.f32.gmra.mrb[0].mxu0 %v781
      %v950 = vpop.f32.mrb[0].mxu0
      %v951 = vadd.f32 %v765, %v950
      %v952 = vpop.f32.mrb[0].mxu0
      %953 = vmatprep.mubr.f32.mxu0 0.0
      %954 = vmatmul.mubr.f32.gmra.mrb[0].mxu0 %v784
      %v955 = vpop.f32.mrb[0].mxu0
      %v956 = vadd.f32 %v765, %v955
      %v957 = vpop.f32.mrb[0].mxu0
      %958 = vmatprep.mubr.f32.mxu0 0.0
      %959 = vmatmul.mubr.f32.gmra.mrb[0].mxu0 %v787
      %v960 = vpop.f32.mrb[0].mxu0
      %v961 = vadd.f32 %v765, %v960
      %v962 = vpop.f32.mrb[0].mxu0
      %963 = vmatprep.mubr.f32.mxu0 0.0
      %964 = vmatmul.mubr.f32.gmra.mrb[0].mxu0 %v790
      %v965 = vpop.f32.mrb[0].mxu0
      %v966 = vadd.f32 %v765, %v965
      %v967 = vpop.f32.mrb[0].mxu0
      %968 = vmatprep.mubr.f32.mxu0 0.0
      %969 = vmatmul.mubr.f32.gmra.mrb[0].mxu0 %v793
      %v970 = vpop.f32.mrb[0].mxu0
      %v971 = vadd.f32 %v765, %v970
      %v972 = vpop.f32.mrb[0].mxu0
      %973 = vmatprep.mubr.f32.mxu0 0.0
      %974 = vmatmul.mubr.f32.gmra.mrb[0].mxu0 %v796
      %v975 = vpop.f32.mrb[0].mxu0
      %v976 = vadd.f32 %v765, %v975
      %v977 = vpop.f32.mrb[0].mxu0
      %978 = vmatprep.mubr.f32.mxu0 0.0
      %979 = vmatmul.mubr.f32.gmra.mrb[0].mxu0 %v799
      %v980 = vpop.f32.mrb[0].mxu0
      %v981 = vadd.f32 %v765, %v980
      %v982 = vpop.f32.mrb[0].mxu0
      %983 = vmatprep.mubr.f32.mxu0 0.0
      %984 = vmatmul.mubr.f32.gmra.mrb[0].mxu0 %v802
      %v985 = vpop.f32.mrb[0].mxu0
      %v986 = vadd.f32 %v765, %v985
      %v987 = vpop.f32.mrb[0].mxu0
      %988 = vmatprep.mubr.f32.mxu0 0.0
      %989 = vmatmul.mubr.f32.gmra.mrb[0].mxu0 %v805
      %v990 = vpop.f32.mrb[0].mxu0
      %v991 = vadd.f32 %v765, %v990
      %v992 = vpop.f32.mrb[0].mxu0
      %993 = vmatprep.mubr.f32.mxu0 0.0
      %994 = vmatmul.mubr.f32.gmra.mrb[0].mxu0 %v808
      %v995 = vpop.f32.mrb[0].mxu0
      %v996 = vadd.f32 %v765, %v995
      %v997 = vpop.f32.mrb[0].mxu0
      %998 = vmatprep.mubr.f32.mxu0 0.0
      %999 = vmatmul.mubr.f32.gmra.mrb[0].mxu0 %v811
      %v1000 = vpop.f32.mrb[0].mxu0
      %v1001 = vadd.f32 %v765, %v1000
      %v1002 = vpop.f32.mrb[0].mxu0
      %1003 = vmatprep.mubr.f32.mxu0 0.0
      %1004 = vmatmul.mubr.f32.gmra.mrb[0].mxu0 %v814
      %v1005 = vpop.f32.mrb[0].mxu0
      %v1006 = vadd.f32 %v765, %v1005
      %v1007 = vpop.f32.mrb[0].mxu0
      %1008 = vmatprep.mubr.f32.mxu0 0.0
      %1009 = vmatmul.mubr.f32.gmra.mrb[0].mxu0 %v817
      %v1010 = vpop.f32.mrb[0].mxu0
      %v1011 = vadd.f32 %v765, %v1010
      %v1012 = vpop.f32.mrb[0].mxu0
      %1013 = vmatprep.mubr.f32.mxu0 0.0
      %1014 = vmatmul.mubr.f32.gmra.mrb[0].mxu0 %v820
      %v1015 = vpop.f32.mrb[0].mxu0
      %v1016 = vadd.f32 %v765, %v1015
      %v1017 = vpop.f32.mrb[0].mxu0
      %1018 = vmatprep.mubr.f32.mxu0 0.0
      %1019 = vmatmul.mubr.f32.gmra.mrb[0].mxu0 %v823
      %v1020 = vpop.f32.mrb[0].mxu0
      %v1021 = vadd.f32 %v765, %v1020
      %v1022 = vpop.f32.mrb[0].mxu0
      %1023 = vmatprep.mubr.f32.mxu0 0.0
      %1024 = vmatmul.mubr.f32.gmra.mrb[0].mxu0 %v826
      %v1025 = vpop.f32.mrb[0].mxu0
      %v1026 = vadd.f32 %v765, %v1025
      %v1027 = vpop.f32.mrb[0].mxu0
      %1028 = vmatprep.mubr.f32.mxu0 0.0
      %1029 = vmatmul.mubr.f32.gmra.mrb[0].mxu0 %v829
      %v1030 = vpop.f32.mrb[0].mxu0
      %v1031 = vadd.f32 %v765, %v1030
      %v1032 = vpop.f32.mrb[0].mxu0
      %1033 = vmatprep.mubr.f32.mxu0 0.0
      %1034 = vmatmul.mubr.f32.gmra.mrb[0].mxu0 %v832
      %v1035 = vpop.f32.mrb[0].mxu0
      %v1036 = vadd.f32 %v765, %v1035
      %v1037 = vpop.f32.mrb[0].mxu0
      %1038 = vmatprep.mubr.f32.mxu0 0.0
      %1039 = vmatmul.mubr.f32.gmra.mrb[0].mxu0 %v835
      %v1040 = vpop.f32.mrb[0].mxu0
      %v1041 = vadd.f32 %v765, %v1040
      %v1042 = vpop.f32.mrb[0].mxu0
      %1043 = vmatprep.mubr.f32.mxu0 0.0
      %1044 = vmatmul.mubr.f32.gmra.mrb[0].mxu0 %v838
      %v1045 = vpop.f32.mrb[0].mxu0
      %v1046 = vadd.f32 %v765, %v1045
      %v1047 = vpop.f32.mrb[0].mxu0
      %1048 = vmatprep.mubr.f32.mxu0 0.0
      %1049 = vmatmul.mubr.f32.gmra.mrb[0].mxu0 %v841
      %v1050 = vpop.f32.mrb[0].mxu0
      %v1051 = vadd.f32 %v765, %v1050
      %v1052 = vpop.f32.mrb[0].mxu0
      %1053 = vmatprep.mubr.f32.mxu0 0.0
      %1054 = vmatmul.mubr.f32.gmra.mrb[0].mxu0 %v844
      %v1055 = vpop.f32.mrb[0].mxu0
      %v1056 = vadd.f32 %v765, %v1055
      %v1057 = vpop.f32.mrb[0].mxu0
      %1058 = vmatprep.mubr.f32.mxu0 0.0
      %1059 = vmatmul.mubr.f32.gmra.mrb[0].mxu0 %v847
      %v1060 = vpop.f32.mrb[0].mxu0
      %v1061 = vadd.f32 %v765, %v1060
      %v1062 = vpop.f32.mrb[0].mxu0
      %1063 = vmatprep.mubr.f32.mxu0 0.0
      %1064 = vmatmul.mubr.f32.gmra.mrb[0].mxu0 %v850
      %v1065 = vpop.f32.mrb[0].mxu0
      %v1066 = vadd.f32 %v765, %v1065
      %v1067 = vpop.f32.mrb[0].mxu0
      %1068 = vmatprep.mubr.f32.mxu0 0.0
      %1069 = vmatmul.mubr.f32.gmra.mrb[0].mxu0 %v853
      %v1070 = vpop.f32.mrb[0].mxu0
      %v1071 = vadd.f32 %v765, %v1070
      %v1072 = vpop.f32.mrb[0].mxu0
      %1073 = vmatprep.mubr.f32.mxu0 0.0
      %1074 = vmatmul.mubr.f32.gmra.mrb[0].mxu0 %v856
      %v1075 = vpop.f32.mrb[0].mxu0
      %v1076 = vadd.f32 %v765, %v1075
      %v1077 = vpop.f32.mrb[0].mxu0
      %1078 = vmatprep.mubr.f32.mxu0 0.0
      %1079 = vmatmul.mubr.f32.gmra.mrb[0].mxu0 %v859
      %v1080 = vpop.f32.mrb[0].mxu0
      %v1081 = vadd.f32 %v765, %v1080
      %v1082 = vpop.f32.mrb[0].mxu0
      %1083 = vmatprep.mubr.f32.mxu0 0.0
      %1084 = vmatmul.mubr.f32.gmra.mrb[0].mxu0 %v862
      %v1085 = vpop.f32.mrb[0].mxu0
      %v1086 = vadd.f32 %v765, %v1085
      %v1087 = vpop.f32.mrb[0].mxu0
      %1088 = vdwg.mxu0
      %vm1089 = vcmask 31744
      %v1090 = vsel %vm1089, %v931, -inf
      %v1091 = vsel %vm1089, %v941, -inf
      %v1092 = vsel %vm1089, %v951, -inf
      %v1093 = vmax.f32 %v1090, %v1092
      %v1094 = vsel %vm1089, %v961, -inf
      %v1095 = vmax.f32 %v1091, %v1094
      %v1096 = vsel %vm1089, %v971, -inf
      %v1097 = vmax.f32 %v1093, %v1096
      %v1098 = vsel %vm1089, %v981, -inf
      %v1099 = vmax.f32 %v1095, %v1098
      %v1100 = vsel %vm1089, %v991, -inf
      %v1101 = vmax.f32 %v1097, %v1100
      %v1102 = vsel %vm1089, %v1001, -inf
      %v1103 = vmax.f32 %v1099, %v1102
      %v1104 = vsel %vm1089, %v1011, -inf
      %v1105 = vmax.f32 %v1101, %v1104
      %v1106 = vsel %vm1089, %v1021, -inf
      %v1107 = vmax.f32 %v1103, %v1106
      %v1108 = vsel %vm1089, %v1031, -inf
      %v1109 = vmax.f32 %v1105, %v1108
      %v1110 = vsel %vm1089, %v1041, -inf
      %v1111 = vmax.f32 %v1107, %v1110
      %v1112 = vsel %vm1089, %v1051, -inf
      %v1113 = vmax.f32 %v1109, %v1112
      %v1114 = vsel %vm1089, %v1061, -inf
      %v1115 = vmax.f32 %v1111, %v1114
      %v1116 = vsel %vm1089, %v1071, -inf
      %v1117 = vmax.f32 %v1113, %v1116
      %v1118 = vsel %vm1089, %v1081, -inf
      %v1119 = vmax.f32 %v1115, %v1118
      %v1120 = vmax.f32 %v1117, %v1119
      %v1121 = vsel %vm1089, %v936, -inf
      %v1122 = vsel %vm1089, %v946, -inf
      %v1123 = vsel %vm1089, %v956, -inf
      %v1124 = vmax.f32 %v1121, %v1123
      %v1125 = vsel %vm1089, %v966, -inf
      %v1126 = vmax.f32 %v1122, %v1125
      %v1127 = vsel %vm1089, %v976, -inf
      %v1128 = vmax.f32 %v1124, %v1127
      %v1129 = vsel %vm1089, %v986, -inf
      %v1130 = vmax.f32 %v1126, %v1129
      %v1131 = vsel %vm1089, %v996, -inf
      %v1132 = vmax.f32 %v1128, %v1131
      %v1133 = vsel %vm1089, %v1006, -inf
      %v1134 = vmax.f32 %v1130, %v1133
      %v1135 = vsel %vm1089, %v1016, -inf
      %v1136 = vmax.f32 %v1132, %v1135
      %v1137 = vsel %vm1089, %v1026, -inf
      %v1138 = vmax.f32 %v1134, %v1137
      %v1139 = vsel %vm1089, %v1036, -inf
      %v1140 = vmax.f32 %v1136, %v1139
      %v1141 = vsel %vm1089, %v1046, -inf
      %v1142 = vmax.f32 %v1138, %v1141
      %v1143 = vsel %vm1089, %v1056, -inf
      %v1144 = vmax.f32 %v1140, %v1143
      %v1145 = vsel %vm1089, %v1066, -inf
      %v1146 = vmax.f32 %v1142, %v1145
      %v1147 = vsel %vm1089, %v1076, -inf
      %v1148 = vmax.f32 %v1144, %v1147
      %v1149 = vsel %vm1089, %v1086, -inf
      %v1150 = vmax.f32 %v1146, %v1149
      %v1151 = vmax.f32 %v1148, %v1150
      %v1152 = vsub.f32 %v931, %v1120
      %v1153 = vsub.f32 %v936, %v1151
      %v1154 = vsub.f32 %v941, %v1120
      %v1155 = vsub.f32 %v946, %v1151
      %v1156 = vsub.f32 %v951, %v1120
      %v1157 = vsub.f32 %v956, %v1151
      %v1158 = vsub.f32 %v961, %v1120
      %v1159 = vsub.f32 %v966, %v1151
      %v1160 = vsub.f32 %v971, %v1120
      %v1161 = vsub.f32 %v976, %v1151
      %v1162 = vsub.f32 %v981, %v1120
      %v1163 = vsub.f32 %v986, %v1151
      %v1164 = vsub.f32 %v991, %v1120
      %v1165 = vsub.f32 %v996, %v1151
      %v1166 = vsub.f32 %v1001, %v1120
      %v1167 = vsub.f32 %v1006, %v1151
      %v1168 = vsub.f32 %v1011, %v1120
      %v1169 = vsub.f32 %v1016, %v1151
      %v1170 = vsub.f32 %v1021, %v1120
      %v1171 = vsub.f32 %v1026, %v1151
      %v1172 = vsub.f32 %v1031, %v1120
      %v1173 = vsub.f32 %v1036, %v1151
      %v1174 = vsub.f32 %v1041, %v1120
      %v1175 = vsub.f32 %v1046, %v1151
      %v1176 = vsub.f32 %v1051, %v1120
      %v1177 = vsub.f32 %v1056, %v1151
      %v1178 = vsub.f32 %v1061, %v1120
      %v1179 = vsub.f32 %v1066, %v1151
      %v1180 = vsub.f32 %v1071, %v1120
      %v1181 = vsub.f32 %v1076, %v1151
      %v1182 = vsub.f32 %v1081, %v1120
      %v1183 = vsub.f32 %v1086, %v1151
      %v1184 = vmul.f32 %v1152, 1.442695
      %v1185 = vpow.pop %v1184
      %v1186 = vmul.f32 %v1153, 1.442695
      %v1187 = vpow.pop %v1186
      %v1188 = vmul.f32 %v1154, 1.442695
      %v1189 = vpow.pop %v1188
      %v1190 = vmul.f32 %v1155, 1.442695
      %v1191 = vpow.pop %v1190
      %v1192 = vmul.f32 %v1156, 1.442695
      %v1193 = vpow.pop %v1192
      %v1194 = vmul.f32 %v1157, 1.442695
      %v1195 = vpow.pop %v1194
      %v1196 = vmul.f32 %v1158, 1.442695
      %v1197 = vpow.pop %v1196
      %v1198 = vmul.f32 %v1159, 1.442695
      %v1199 = vpow.pop %v1198
      %v1200 = vmul.f32 %v1160, 1.442695
      %v1201 = vpow.pop %v1200
      %v1202 = vmul.f32 %v1161, 1.442695
      %v1203 = vpow.pop %v1202
      %v1204 = vmul.f32 %v1162, 1.442695
      %v1205 = vpow.pop %v1204
      %v1206 = vmul.f32 %v1163, 1.442695
      %v1207 = vpow.pop %v1206
      %v1208 = vmul.f32 %v1164, 1.442695
      %v1209 = vpow.pop %v1208
      %v1210 = vmul.f32 %v1165, 1.442695
      %v1211 = vpow.pop %v1210
      %v1212 = vmul.f32 %v1166, 1.442695
      %v1213 = vpow.pop %v1212
      %v1214 = vmul.f32 %v1167, 1.442695
      %v1215 = vpow.pop %v1214
      %v1216 = vmul.f32 %v1168, 1.442695
      %v1217 = vpow.pop %v1216
      %v1218 = vmul.f32 %v1169, 1.442695
      %v1219 = vpow.pop %v1218
      %v1220 = vmul.f32 %v1170, 1.442695
      %v1221 = vpow.pop %v1220
      %v1222 = vmul.f32 %v1171, 1.442695
      %v1223 = vpow.pop %v1222
      %v1224 = vmul.f32 %v1172, 1.442695
      %v1225 = vpow.pop %v1224
      %v1226 = vmul.f32 %v1173, 1.442695
      %v1227 = vpow.pop %v1226
      %v1228 = vmul.f32 %v1174, 1.442695
      %v1229 = vpow.pop %v1228
      %v1230 = vmul.f32 %v1175, 1.442695
      %v1231 = vpow.pop %v1230
      %v1232 = vmul.f32 %v1176, 1.442695
      %v1233 = vpow.pop %v1232
      %v1234 = vmul.f32 %v1177, 1.442695
      %v1235 = vpow.pop %v1234
      %v1236 = vmul.f32 %v1178, 1.442695
      %v1237 = vpow.pop %v1236
      %v1238 = vmul.f32 %v1179, 1.442695
      %v1239 = vpow.pop %v1238
      %v1240 = vmul.f32 %v1180, 1.442695
      %v1241 = vpow.pop %v1240
      %v1242 = vmul.f32 %v1181, 1.442695
      %v1243 = vpow.pop %v1242
      %v1244 = vmul.f32 %v1182, 1.442695
      %v1245 = vpow.pop %v1244
      %v1246 = vmul.f32 %v1183, 1.442695
      %v1247 = vpow.pop %v1246
      %v1248 = vsel %vm1089, %v1185, 0.0
      %v1249 = vsel %vm1089, %v1189, 0.0
      %v1250 = vadd.f32 %v1248, %v1249
      %v1251 = vsel %vm1089, %v1193, 0.0
      %v1252 = vadd.f32 %v1250, %v1251
      %v1253 = vsel %vm1089, %v1197, 0.0
      %v1254 = vadd.f32 %v1252, %v1253
      %v1255 = vsel %vm1089, %v1201, 0.0
      %v1256 = vadd.f32 %v1254, %v1255
      %v1257 = vsel %vm1089, %v1205, 0.0
      %v1258 = vadd.f32 %v1256, %v1257
      %v1259 = vsel %vm1089, %v1209, 0.0
      %v1260 = vadd.f32 %v1258, %v1259
      %v1261 = vsel %vm1089, %v1213, 0.0
      %v1262 = vadd.f32 %v1260, %v1261
      %v1263 = vsel %vm1089, %v1217, 0.0
      %v1264 = vadd.f32 %v1262, %v1263
      %v1265 = vsel %vm1089, %v1221, 0.0
      %v1266 = vadd.f32 %v1264, %v1265
      %v1267 = vsel %vm1089, %v1225, 0.0
      %v1268 = vadd.f32 %v1266, %v1267
      %v1269 = vsel %vm1089, %v1229, 0.0
      %v1270 = vadd.f32 %v1268, %v1269
      %v1271 = vsel %vm1089, %v1233, 0.0
      %v1272 = vadd.f32 %v1270, %v1271
      %v1273 = vsel %vm1089, %v1237, 0.0
      %v1274 = vadd.f32 %v1272, %v1273
      %v1275 = vsel %vm1089, %v1241, 0.0
      %v1276 = vadd.f32 %v1274, %v1275
      %v1277 = vsel %vm1089, %v1245, 0.0
      %v1278 = vadd.f32 %v1276, %v1277
      %v1279 = vsel %vm1089, %v1187, 0.0
      %v1280 = vsel %vm1089, %v1191, 0.0
      %v1281 = vadd.f32 %v1279, %v1280
      %v1282 = vsel %vm1089, %v1195, 0.0
      %v1283 = vadd.f32 %v1281, %v1282
      %v1284 = vsel %vm1089, %v1199, 0.0
      %v1285 = vadd.f32 %v1283, %v1284
      %v1286 = vsel %vm1089, %v1203, 0.0
      %v1287 = vadd.f32 %v1285, %v1286
      %v1288 = vsel %vm1089, %v1207, 0.0
      %v1289 = vadd.f32 %v1287, %v1288
      %v1290 = vsel %vm1089, %v1211, 0.0
      %v1291 = vadd.f32 %v1289, %v1290
      %v1292 = vsel %vm1089, %v1215, 0.0
      %v1293 = vadd.f32 %v1291, %v1292
      %v1294 = vsel %vm1089, %v1219, 0.0
      %v1295 = vadd.f32 %v1293, %v1294
      %v1296 = vsel %vm1089, %v1223, 0.0
      %v1297 = vadd.f32 %v1295, %v1296
      %v1298 = vsel %vm1089, %v1227, 0.0
      %v1299 = vadd.f32 %v1297, %v1298
      %v1300 = vsel %vm1089, %v1231, 0.0
      %v1301 = vadd.f32 %v1299, %v1300
      %v1302 = vsel %vm1089, %v1235, 0.0
      %v1303 = vadd.f32 %v1301, %v1302
      %v1304 = vsel %vm1089, %v1239, 0.0
      %v1305 = vadd.f32 %v1303, %v1304
      %v1306 = vsel %vm1089, %v1243, 0.0
      %v1307 = vadd.f32 %v1305, %v1306
      %v1308 = vsel %vm1089, %v1247, 0.0
      %v1309 = vadd.f32 %v1307, %v1308
      %v1310 = vrcp.pop %v1278
      %v1311 = vrcp.pop %v1309
      %v1312 = vmul.f32 %v1185, %v1310
      %v1313 = vmul.f32 %v1187, %v1311
      %v1314 = vmul.f32 %v1189, %v1310
      %v1315 = vmul.f32 %v1191, %v1311
      %v1316 = vmul.f32 %v1193, %v1310
      %v1317 = vmul.f32 %v1195, %v1311
      %v1318 = vmul.f32 %v1197, %v1310
      %v1319 = vmul.f32 %v1199, %v1311
      %v1320 = vmul.f32 %v1201, %v1310
      %v1321 = vmul.f32 %v1203, %v1311
      %v1322 = vmul.f32 %v1205, %v1310
      %v1323 = vmul.f32 %v1207, %v1311
      %v1324 = vmul.f32 %v1209, %v1310
      %v1325 = vmul.f32 %v1211, %v1311
      %v1326 = vmul.f32 %v1213, %v1310
      %v1327 = vmul.f32 %v1215, %v1311
      %v1328 = vmul.f32 %v1217, %v1310
      %v1329 = vmul.f32 %v1219, %v1311
      %v1330 = vmul.f32 %v1221, %v1310
      %v1331 = vmul.f32 %v1223, %v1311
      %v1332 = vmul.f32 %v1225, %v1310
      %v1333 = vmul.f32 %v1227, %v1311
      %v1334 = vmul.f32 %v1229, %v1310
      %v1335 = vmul.f32 %v1231, %v1311
      %v1336 = vmul.f32 %v1233, %v1310
      %v1337 = vmul.f32 %v1235, %v1311
      %v1338 = vmul.f32 %v1237, %v1310
      %v1339 = vmul.f32 %v1239, %v1311
      %v1340 = vmul.f32 %v1241, %v1310
      %v1341 = vmul.f32 %v1243, %v1311
      %v1342 = vmul.f32 %v1245, %v1310
      %v1343 = vmul.f32 %v1247, %v1311
      %v1344 = vxor.u32 %v931, 2147483648
      %v1345 = vxor.u32 %v936, 2147483648
      %v1346 = vxor.u32 %v941, 2147483648
      %v1347 = vxor.u32 %v946, 2147483648
      %v1348 = vxor.u32 %v951, 2147483648
      %v1349 = vxor.u32 %v956, 2147483648
      %v1350 = vxor.u32 %v961, 2147483648
      %v1351 = vxor.u32 %v966, 2147483648
      %v1352 = vxor.u32 %v971, 2147483648
      %v1353 = vxor.u32 %v976, 2147483648
      %v1354 = vxor.u32 %v981, 2147483648
      %v1355 = vxor.u32 %v986, 2147483648
      %v1356 = vxor.u32 %v991, 2147483648
      %v1357 = vxor.u32 %v996, 2147483648
      %v1358 = vxor.u32 %v1001, 2147483648
      %v1359 = vxor.u32 %v1006, 2147483648
      %v1360 = vxor.u32 %v1011, 2147483648
      %v1361 = vxor.u32 %v1016, 2147483648
      %v1362 = vxor.u32 %v1021, 2147483648
      %v1363 = vxor.u32 %v1026, 2147483648
      %v1364 = vxor.u32 %v1031, 2147483648
      %v1365 = vxor.u32 %v1036, 2147483648
      %v1366 = vxor.u32 %v1041, 2147483648
      %v1367 = vxor.u32 %v1046, 2147483648
      %v1368 = vxor.u32 %v1051, 2147483648
      %v1369 = vxor.u32 %v1056, 2147483648
      %v1370 = vxor.u32 %v1061, 2147483648
      %v1371 = vxor.u32 %v1066, 2147483648
      %v1372 = vxor.u32 %v1071, 2147483648
      %v1373 = vxor.u32 %v1076, 2147483648
      %v1374 = vxor.u32 %v1081, 2147483648
      %v1375 = vxor.u32 %v1086, 2147483648
      %v1376 = vmul.f32 %v1344, 1.442695
      %v1377 = vpow.pop %v1376
      %v1378 = vmul.f32 %v1345, 1.442695
      %v1379 = vpow.pop %v1378
      %v1380 = vmul.f32 %v1346, 1.442695
      %v1381 = vpow.pop %v1380
      %v1382 = vmul.f32 %v1347, 1.442695
      %v1383 = vpow.pop %v1382
      %v1384 = vmul.f32 %v1348, 1.442695
      %v1385 = vpow.pop %v1384
      %v1386 = vmul.f32 %v1349, 1.442695
      %v1387 = vpow.pop %v1386
      %v1388 = vmul.f32 %v1350, 1.442695
      %v1389 = vpow.pop %v1388
      %v1390 = vmul.f32 %v1351, 1.442695
      %v1391 = vpow.pop %v1390
      %v1392 = vmul.f32 %v1352, 1.442695
      %v1393 = vpow.pop %v1392
      %v1394 = vmul.f32 %v1353, 1.442695
      %v1395 = vpow.pop %v1394
      %v1396 = vmul.f32 %v1354, 1.442695
      %v1397 = vpow.pop %v1396
      %v1398 = vmul.f32 %v1355, 1.442695
      %v1399 = vpow.pop %v1398
      %v1400 = vmul.f32 %v1356, 1.442695
      %v1401 = vpow.pop %v1400
      %v1402 = vmul.f32 %v1357, 1.442695
      %v1403 = vpow.pop %v1402
      %v1404 = vmul.f32 %v1358, 1.442695
      %v1405 = vpow.pop %v1404
      %v1406 = vmul.f32 %v1359, 1.442695
      %v1407 = vpow.pop %v1406
      %v1408 = vmul.f32 %v1360, 1.442695
      %v1409 = vpow.pop %v1408
      %v1410 = vmul.f32 %v1361, 1.442695
      %v1411 = vpow.pop %v1410
      %v1412 = vmul.f32 %v1362, 1.442695
      %v1413 = vpow.pop %v1412
      %v1414 = vmul.f32 %v1363, 1.442695
      %v1415 = vpow.pop %v1414
      %v1416 = vmul.f32 %v1364, 1.442695
      %v1417 = vpow.pop %v1416
      %v1418 = vmul.f32 %v1365, 1.442695
      %v1419 = vpow.pop %v1418
      %v1420 = vmul.f32 %v1366, 1.442695
      %v1421 = vpow.pop %v1420
      %v1422 = vmul.f32 %v1367, 1.442695
      %v1423 = vpow.pop %v1422
      %v1424 = vmul.f32 %v1368, 1.442695
      %v1425 = vpow.pop %v1424
      %v1426 = vmul.f32 %v1369, 1.442695
      %v1427 = vpow.pop %v1426
      %v1428 = vmul.f32 %v1370, 1.442695
      %v1429 = vpow.pop %v1428
      %v1430 = vmul.f32 %v1371, 1.442695
      %v1431 = vpow.pop %v1430
      %v1432 = vmul.f32 %v1372, 1.442695
      %v1433 = vpow.pop %v1432
      %v1434 = vmul.f32 %v1373, 1.442695
      %v1435 = vpow.pop %v1434
      %v1436 = vmul.f32 %v1374, 1.442695
      %v1437 = vpow.pop %v1436
      %v1438 = vmul.f32 %v1375, 1.442695
      %v1439 = vpow.pop %v1438
      %v1440 = vadd.f32 %v1377, 1.0
      %v1441 = vadd.f32 %v1379, 1.0
      %v1442 = vadd.f32 %v1381, 1.0
      %v1443 = vadd.f32 %v1383, 1.0
      %v1444 = vadd.f32 %v1385, 1.0
      %v1445 = vadd.f32 %v1387, 1.0
      %v1446 = vadd.f32 %v1389, 1.0
      %v1447 = vadd.f32 %v1391, 1.0
      %v1448 = vadd.f32 %v1393, 1.0
      %v1449 = vadd.f32 %v1395, 1.0
      %v1450 = vadd.f32 %v1397, 1.0
      %v1451 = vadd.f32 %v1399, 1.0
      %v1452 = vadd.f32 %v1401, 1.0
      %v1453 = vadd.f32 %v1403, 1.0
      %v1454 = vadd.f32 %v1405, 1.0
      %v1455 = vadd.f32 %v1407, 1.0
      %v1456 = vadd.f32 %v1409, 1.0
      %v1457 = vadd.f32 %v1411, 1.0
      %v1458 = vadd.f32 %v1413, 1.0
      %v1459 = vadd.f32 %v1415, 1.0
      %v1460 = vadd.f32 %v1417, 1.0
      %v1461 = vadd.f32 %v1419, 1.0
      %v1462 = vadd.f32 %v1421, 1.0
      %v1463 = vadd.f32 %v1423, 1.0
      %v1464 = vadd.f32 %v1425, 1.0
      %v1465 = vadd.f32 %v1427, 1.0
      %v1466 = vadd.f32 %v1429, 1.0
      %v1467 = vadd.f32 %v1431, 1.0
      %v1468 = vadd.f32 %v1433, 1.0
      %v1469 = vadd.f32 %v1435, 1.0
      %v1470 = vadd.f32 %v1437, 1.0
      %v1471 = vadd.f32 %v1439, 1.0
      %v1472 = vrcp.pop %v1440
      %v1473 = vmul.f32 1.0, %v1472
      %v1474 = vrcp.pop %v1441
      %v1475 = vmul.f32 1.0, %v1474
      %v1476 = vrcp.pop %v1442
      %v1477 = vmul.f32 1.0, %v1476
      %v1478 = vrcp.pop %v1443
      %v1479 = vmul.f32 1.0, %v1478
      %v1480 = vrcp.pop %v1444
      %v1481 = vmul.f32 1.0, %v1480
      %v1482 = vrcp.pop %v1445
      %v1483 = vmul.f32 1.0, %v1482
      %v1484 = vrcp.pop %v1446
      %v1485 = vmul.f32 1.0, %v1484
      %v1486 = vrcp.pop %v1447
      %v1487 = vmul.f32 1.0, %v1486
      %v1488 = vrcp.pop %v1448
      %v1489 = vmul.f32 1.0, %v1488
      %v1490 = vrcp.pop %v1449
      %v1491 = vmul.f32 1.0, %v1490
      %v1492 = vrcp.pop %v1450
      %v1493 = vmul.f32 1.0, %v1492
      %v1494 = vrcp.pop %v1451
      %v1495 = vmul.f32 1.0, %v1494
      %v1496 = vrcp.pop %v1452
      %v1497 = vmul.f32 1.0, %v1496
      %v1498 = vrcp.pop %v1453
      %v1499 = vmul.f32 1.0, %v1498
      %v1500 = vrcp.pop %v1454
      %v1501 = vmul.f32 1.0, %v1500
      %v1502 = vrcp.pop %v1455
      %v1503 = vmul.f32 1.0, %v1502
      %v1504 = vrcp.pop %v1456
      %v1505 = vmul.f32 1.0, %v1504
      %v1506 = vrcp.pop %v1457
      %v1507 = vmul.f32 1.0, %v1506
      %v1508 = vrcp.pop %v1458
      %v1509 = vmul.f32 1.0, %v1508
      %v1510 = vrcp.pop %v1459
      %v1511 = vmul.f32 1.0, %v1510
      %v1512 = vrcp.pop %v1460
      %v1513 = vmul.f32 1.0, %v1512
      %v1514 = vrcp.pop %v1461
      %v1515 = vmul.f32 1.0, %v1514
      %v1516 = vrcp.pop %v1462
      %v1517 = vmul.f32 1.0, %v1516
      %v1518 = vrcp.pop %v1463
      %v1519 = vmul.f32 1.0, %v1518
      %v1520 = vrcp.pop %v1464
      %v1521 = vmul.f32 1.0, %v1520
      %v1522 = vrcp.pop %v1465
      %v1523 = vmul.f32 1.0, %v1522
      %v1524 = vrcp.pop %v1466
      %v1525 = vmul.f32 1.0, %v1524
      %v1526 = vrcp.pop %v1467
      %v1527 = vmul.f32 1.0, %v1526
      %v1528 = vrcp.pop %v1468
      %v1529 = vmul.f32 1.0, %v1528
      %v1530 = vrcp.pop %v1469
      %v1531 = vmul.f32 1.0, %v1530
      %v1532 = vrcp.pop %v1470
      %v1533 = vmul.f32 1.0, %v1532
      %v1534 = vrcp.pop %v1471
      %v1535 = vmul.f32 1.0, %v1534
      %1568 = vrot.lane.b32.xlu0 %v1312, 4
      %v1569 = vpop.permute.xlu0 %1568
      %1570 = vrot.lane.b32.xlu0 %v1313, 4
      %v1571 = vpop.permute.xlu0 %1570
      %1572 = vrot.lane.b32.xlu0 %v1314, 4
      %v1573 = vpop.permute.xlu0 %1572
      %1574 = vrot.lane.b32.xlu0 %v1315, 4
      %v1575 = vpop.permute.xlu0 %1574
      %1576 = vrot.lane.b32.xlu0 %v1316, 4
      %v1577 = vpop.permute.xlu0 %1576
      %1578 = vrot.lane.b32.xlu0 %v1317, 4
      %v1579 = vpop.permute.xlu0 %1578
      %1580 = vrot.lane.b32.xlu0 %v1318, 4
      %v1581 = vpop.permute.xlu0 %1580
      %1582 = vrot.lane.b32.xlu0 %v1319, 4
      %v1583 = vpop.permute.xlu0 %1582
      %1584 = vrot.lane.b32.xlu0 %v1320, 4
      %v1585 = vpop.permute.xlu0 %1584
      %1586 = vrot.lane.b32.xlu0 %v1321, 4
      %v1587 = vpop.permute.xlu0 %1586
      %1588 = vrot.lane.b32.xlu0 %v1322, 4
      %v1589 = vpop.permute.xlu0 %1588
      %1590 = vrot.lane.b32.xlu0 %v1323, 4
      %v1591 = vpop.permute.xlu0 %1590
      %1592 = vrot.lane.b32.xlu0 %v1324, 4
      %v1593 = vpop.permute.xlu0 %1592
      %1594 = vrot.lane.b32.xlu0 %v1325, 4
      %v1595 = vpop.permute.xlu0 %1594
      %1596 = vrot.lane.b32.xlu0 %v1326, 4
      %v1597 = vpop.permute.xlu0 %1596
      %1598 = vrot.lane.b32.xlu0 %v1327, 4
      %v1599 = vpop.permute.xlu0 %1598
      %1600 = vrot.lane.b32.xlu0 %v1328, 4
      %v1601 = vpop.permute.xlu0 %1600
      %1602 = vrot.lane.b32.xlu0 %v1329, 4
      %v1603 = vpop.permute.xlu0 %1602
      %1604 = vrot.lane.b32.xlu0 %v1330, 4
      %v1605 = vpop.permute.xlu0 %1604
      %1606 = vrot.lane.b32.xlu0 %v1331, 4
      %v1607 = vpop.permute.xlu0 %1606
      %1608 = vrot.lane.b32.xlu0 %v1332, 4
      %v1609 = vpop.permute.xlu0 %1608
      %1610 = vrot.lane.b32.xlu0 %v1333, 4
      %v1611 = vpop.permute.xlu0 %1610
      %1612 = vrot.lane.b32.xlu0 %v1334, 4
      %v1613 = vpop.permute.xlu0 %1612
      %1614 = vrot.lane.b32.xlu0 %v1335, 4
      %v1615 = vpop.permute.xlu0 %1614
      %1616 = vrot.lane.b32.xlu0 %v1336, 4
      %v1617 = vpop.permute.xlu0 %1616
      %1618 = vrot.lane.b32.xlu0 %v1337, 4
      %v1619 = vpop.permute.xlu0 %1618
      %1620 = vrot.lane.b32.xlu0 %v1338, 4
      %v1621 = vpop.permute.xlu0 %1620
      %1622 = vrot.lane.b32.xlu0 %v1339, 4
      %v1623 = vpop.permute.xlu0 %1622
      %1624 = vrot.lane.b32.xlu0 %v1340, 4
      %v1625 = vpop.permute.xlu0 %1624
      %1626 = vrot.lane.b32.xlu0 %v1341, 4
      %v1627 = vpop.permute.xlu0 %1626
      %1628 = vrot.lane.b32.xlu0 %v1342, 4
      %v1629 = vpop.permute.xlu0 %1628
      %1630 = vrot.lane.b32.xlu0 %v1343, 4
      %v1631 = vpop.permute.xlu0 %1630
      %v1664 = vmul.f32 %v1473, %v1569
      %v1665 = vmul.f32 %v1475, %v1571
      %v1666 = vmul.f32 %v1477, %v1573
      %v1667 = vmul.f32 %v1479, %v1575
      %v1668 = vmul.f32 %v1481, %v1577
      %v1669 = vmul.f32 %v1483, %v1579
      %v1670 = vmul.f32 %v1485, %v1581
      %v1671 = vmul.f32 %v1487, %v1583
      %v1672 = vmul.f32 %v1489, %v1585
      %v1673 = vmul.f32 %v1491, %v1587
      %v1674 = vmul.f32 %v1493, %v1589
      %v1675 = vmul.f32 %v1495, %v1591
      %v1676 = vmul.f32 %v1497, %v1593
      %v1677 = vmul.f32 %v1499, %v1595
      %v1678 = vmul.f32 %v1501, %v1597
      %v1679 = vmul.f32 %v1503, %v1599
      %v1680 = vmul.f32 %v1505, %v1601
      %v1681 = vmul.f32 %v1507, %v1603
      %v1682 = vmul.f32 %v1509, %v1605
      %v1683 = vmul.f32 %v1511, %v1607
      %v1684 = vmul.f32 %v1513, %v1609
      %v1685 = vmul.f32 %v1515, %v1611
      %v1686 = vmul.f32 %v1517, %v1613
      %v1687 = vmul.f32 %v1519, %v1615
      %v1688 = vmul.f32 %v1521, %v1617
      %v1689 = vmul.f32 %v1523, %v1619
      %v1690 = vmul.f32 %v1525, %v1621
      %v1691 = vmul.f32 %v1527, %v1623
      %v1692 = vmul.f32 %v1529, %v1625
      %v1693 = vmul.f32 %v1531, %v1627
      %v1694 = vmul.f32 %v1533, %v1629
      %v1695 = vmul.f32 %v1535, %v1631
      %vm1696 = vcmask 64544
      %v1697 = vsel %vm1696, %v1664, 0.0
      %v1698 = vsel %vm1696, %v1666, 0.0
      %v1699 = vadd.f32 %v1697, %v1698
      %v1700 = vsel %vm1696, %v1668, 0.0
      %v1701 = vadd.f32 %v1699, %v1700
      %v1702 = vsel %vm1696, %v1670, 0.0
      %v1703 = vadd.f32 %v1701, %v1702
      %v1704 = vsel %vm1696, %v1672, 0.0
      %v1705 = vadd.f32 %v1703, %v1704
      %v1706 = vsel %vm1696, %v1674, 0.0
      %v1707 = vadd.f32 %v1705, %v1706
      %v1708 = vsel %vm1696, %v1676, 0.0
      %v1709 = vadd.f32 %v1707, %v1708
      %v1710 = vsel %vm1696, %v1678, 0.0
      %v1711 = vadd.f32 %v1709, %v1710
      %v1712 = vsel %vm1696, %v1680, 0.0
      %v1713 = vadd.f32 %v1711, %v1712
      %v1714 = vsel %vm1696, %v1682, 0.0
      %v1715 = vadd.f32 %v1713, %v1714
      %v1716 = vsel %vm1696, %v1684, 0.0
      %v1717 = vadd.f32 %v1715, %v1716
      %v1718 = vsel %vm1696, %v1686, 0.0
      %v1719 = vadd.f32 %v1717, %v1718
      %v1720 = vsel %vm1696, %v1688, 0.0
      %v1721 = vadd.f32 %v1719, %v1720
      %v1722 = vsel %vm1696, %v1690, 0.0
      %v1723 = vadd.f32 %v1721, %v1722
      %v1724 = vsel %vm1696, %v1692, 0.0
      %v1725 = vadd.f32 %v1723, %v1724
      %v1726 = vsel %vm1696, %v1694, 0.0
      %v1727 = vadd.f32 %v1725, %v1726
      %v1728 = vsel %vm1696, %v1665, 0.0
      %v1729 = vsel %vm1696, %v1667, 0.0
      %v1730 = vadd.f32 %v1728, %v1729
      %v1731 = vsel %vm1696, %v1669, 0.0
      %v1732 = vadd.f32 %v1730, %v1731
      %v1733 = vsel %vm1696, %v1671, 0.0
      %v1734 = vadd.f32 %v1732, %v1733
      %v1735 = vsel %vm1696, %v1673, 0.0
      %v1736 = vadd.f32 %v1734, %v1735
      %v1737 = vsel %vm1696, %v1675, 0.0
      %v1738 = vadd.f32 %v1736, %v1737
      %v1739 = vsel %vm1696, %v1677, 0.0
      %v1740 = vadd.f32 %v1738, %v1739
      %v1741 = vsel %vm1696, %v1679, 0.0
      %v1742 = vadd.f32 %v1740, %v1741
      %v1743 = vsel %vm1696, %v1681, 0.0
      %v1744 = vadd.f32 %v1742, %v1743
      %v1745 = vsel %vm1696, %v1683, 0.0
      %v1746 = vadd.f32 %v1744, %v1745
      %v1747 = vsel %vm1696, %v1685, 0.0
      %v1748 = vadd.f32 %v1746, %v1747
      %v1749 = vsel %vm1696, %v1687, 0.0
      %v1750 = vadd.f32 %v1748, %v1749
      %v1751 = vsel %vm1696, %v1689, 0.0
      %v1752 = vadd.f32 %v1750, %v1751
      %v1753 = vsel %vm1696, %v1691, 0.0
      %v1754 = vadd.f32 %v1752, %v1753
      %v1755 = vsel %vm1696, %v1693, 0.0
      %v1756 = vadd.f32 %v1754, %v1755
      %v1757 = vsel %vm1696, %v1695, 0.0
      %v1758 = vadd.f32 %v1756, %v1757
      %vm1759 = vcmask 162944
      %v1760 = vsel %vm1759, %v279, 0.0
      %v1761 = vsel %vm1759, %v281, 0.0
      %v1762 = vadd.f32 %v1760, %v1761
      %v1763 = vsel %vm1759, %v283, 0.0
      %v1764 = vadd.f32 %v1762, %v1763
      %v1765 = vsel %vm1759, %v285, 0.0
      %v1766 = vadd.f32 %v1764, %v1765
      %v1767 = vsel %vm1759, %v287, 0.0
      %v1768 = vadd.f32 %v1766, %v1767
      %v1769 = vsel %vm1759, %v289, 0.0
      %v1770 = vadd.f32 %v1768, %v1769
      %v1771 = vsel %vm1759, %v291, 0.0
      %v1772 = vadd.f32 %v1770, %v1771
      %v1773 = vsel %vm1759, %v293, 0.0
      %v1774 = vadd.f32 %v1772, %v1773
      %v1775 = vsel %vm1759, %v295, 0.0
      %v1776 = vadd.f32 %v1774, %v1775
      %v1777 = vsel %vm1759, %v297, 0.0
      %v1778 = vadd.f32 %v1776, %v1777
      %v1779 = vsel %vm1759, %v299, 0.0
      %v1780 = vadd.f32 %v1778, %v1779
      %v1781 = vsel %vm1759, %v301, 0.0
      %v1782 = vadd.f32 %v1780, %v1781
      %v1783 = vsel %vm1759, %v303, 0.0
      %v1784 = vadd.f32 %v1782, %v1783
      %v1785 = vsel %vm1759, %v305, 0.0
      %v1786 = vadd.f32 %v1784, %v1785
      %v1787 = vsel %vm1759, %v307, 0.0
      %v1788 = vadd.f32 %v1786, %v1787
      %v1789 = vsel %vm1759, %v309, 0.0
      %v1790 = vadd.f32 %v1788, %v1789
      %v1791 = vsel %vm1759, %v280, 0.0
      %v1792 = vsel %vm1759, %v282, 0.0
      %v1793 = vadd.f32 %v1791, %v1792
      %v1794 = vsel %vm1759, %v284, 0.0
      %v1795 = vadd.f32 %v1793, %v1794
      %v1796 = vsel %vm1759, %v286, 0.0
      %v1797 = vadd.f32 %v1795, %v1796
      %v1798 = vsel %vm1759, %v288, 0.0
      %v1799 = vadd.f32 %v1797, %v1798
      %v1800 = vsel %vm1759, %v290, 0.0
      %v1801 = vadd.f32 %v1799, %v1800
      %v1802 = vsel %vm1759, %v292, 0.0
      %v1803 = vadd.f32 %v1801, %v1802
      %v1804 = vsel %vm1759, %v294, 0.0
      %v1805 = vadd.f32 %v1803, %v1804
      %v1806 = vsel %vm1759, %v296, 0.0
      %v1807 = vadd.f32 %v1805, %v1806
      %v1808 = vsel %vm1759, %v298, 0.0
      %v1809 = vadd.f32 %v1807, %v1808
      %v1810 = vsel %vm1759, %v300, 0.0
      %v1811 = vadd.f32 %v1809, %v1810
      %v1812 = vsel %vm1759, %v302, 0.0
      %v1813 = vadd.f32 %v1811, %v1812
      %v1814 = vsel %vm1759, %v304, 0.0
      %v1815 = vadd.f32 %v1813, %v1814
      %v1816 = vsel %vm1759, %v306, 0.0
      %v1817 = vadd.f32 %v1815, %v1816
      %v1818 = vsel %vm1759, %v308, 0.0
      %v1819 = vadd.f32 %v1817, %v1818
      %v1820 = vsel %vm1759, %v310, 0.0
      %v1821 = vadd.f32 %v1819, %v1820
      %v1822 = vrcp.pop 16.0
      %v1823 = vmul.f32 %v1790, %v1822
      %v1824 = vmul.f32 %v1821, %v1822
      %1827 = vrot.lane.b32.xlu0 %v1823, 116
      %v1828 = vpop.permute.xlu0 %1827
      %1829 = vrot.lane.b32.xlu0 %v1824, 116
      %v1830 = vpop.permute.xlu0 %1829
      %v1833 = vadd.f32 %v1727, %v1828
      %v1834 = vadd.f32 %v1758, %v1830
      %1837 = vrot.lane.b32.xlu0 %v1833, 124
      %v1838 = vpop.permute.xlu0 %1837
      %1839 = vrot.lane.b32.xlu0 %v1834, 124
      %v1840 = vpop.permute.xlu0 %1839
      %1843 = vst.msk [vmem:[%s278] sm:$0xff] %vm1089, %v1838
      %1844 = vst.msk [vmem:[%s278 + $0x8] sm:$0xff] %vm1089, %v1840
      %p1845 = scmp.lt.s32.totalorder %s18, 1
      %s1846 = scalar_select %p1845, %s18, 1
      %s1847 = smul.addr %s1846, 2
      %s1848 = smul.addr %s1847, 8
      %s1849 = scalar_lea.vmem %s7, %s1848
      // Predicated region
      $region49: #{attention_pool_se2d_xf_res.1} parent=47 // pred_check
        %p1850 = pneg %p188
      $region50: #{attention_pool_se2d_xf_res.1} parent=47 // pred_check_branch
        %1852 = sbr.rel (%p1850) target = $region52
      $region51: #{attention_pool_se2d_xf_res.1} parent=47 // pred_region
        _
      $region52: #{attention_pool_se2d_xf_res.1} parent=47 // pred_fallthru
        _
    $region48: #{attention_pool_se2d_xf_res.1} parent=5 // pred_fallthru
      _
    %p1853 = scmp.le.s32.totalorder 2, %s13
    // Predicated region
    $region53: #{attention_pool_se2d_xf_res.1} parent=5 // pred_check
      %p1854 = pneg %p1853
    $region54: #{attention_pool_se2d_xf_res.1} parent=5 // pred_check_branch
      %1856 = sbr.rel (%p1854) target = $region56
    $region55: #{attention_pool_se2d_xf_res.1} parent=5 // pred_region
      %s1857 = ssub.s32 %s13, 2
      // Predicated region
      $region57: #{attention_pool_se2d_xf_res.1} parent=55 // pred_check
        %p1858 = pneg %p194
      $region58: #{attention_pool_se2d_xf_res.1} parent=55 // pred_check_branch
        %1860 = sbr.rel (%p1858) target = $region60
      $region59: #{attention_pool_se2d_xf_res.1} parent=55 // pred_region
        %p1861 = scmp.lt.s32.totalorder %s19, 1
        %s1862 = scalar_select %p1861, %s19, 1
        %s1863 = smul.addr %s1862, 2
        %s1864 = smul.addr %s1863, 8
        %s1865 = scalar_lea.vmem %s7, %s1864
      $region60: #{attention_pool_se2d_xf_res.1} parent=55 // pred_fallthru
        _
    $region56: #{attention_pool_se2d_xf_res.1} parent=5 // pred_fallthru
      _
  $region6: #{attention_pool_se2d_xf_res.1} parent=0 // loop_footer
    %s17 = sadd.s32 1, %s13
  $region7: #{attention_pool_se2d_xf_res.1} parent=0 // loop_footer_branch
    %12 = sbr.rel target = $region3
  $region8: #{attention_pool_se2d_xf_res.1} parent=0 // loop_exit
    _

</llo_original>
